<compile_context>
chip_gen: v6e
topology: v6e:2x2x1
jax: 0.10.0
libtpu: 0.0.40
codegen_flags: <defaults>
</compile_context>

<pallas_src>
import math

import jax
import jax.numpy as jnp
from jax import lax
from jax.experimental import pallas as pl
from jax.experimental.pallas import tpu as pltpu

INPUT_SIZE = 800
HIDDEN = (500, 200, 100, 10)
EPS = 1e-5

_DIMS = (INPUT_SIZE,) + HIDDEN                                   # fc1..fc4
_W_BYTES = 2 * sum(_DIMS[i] * _DIMS[i + 1] for i in range(4))    # bf16 weights
_P_BYTES = 4 * (3 * sum(HIDDEN[:3]) + 5 * HIDDEN[3])             # packed f32
_VMEM_CAP = 32 << 20   # stay well under v7x's 64 MiB physical per-core VMEM


def _layer_core(h_bf16, w_ref, p_ref, inv_n):
    """fc (bf16 MXU operands, f32 acc) -> bias -> ReLU -> BN statistics.

    p_ref rows: 0 = bias, 1 = gamma, 2 = beta (extra rows ignored here).
    Returns (z_centered, bn_scale_row, beta_row); the BN output is
    z_centered * bn_scale + beta  (biased variance, eps=1e-5).
    """
    p = p_ref[...]                                            # (rows, fan_out) f32
    z = jnp.dot(h_bf16, w_ref[...],
                preferred_element_type=jnp.float32) + p[0:1, :]
    z = jnp.maximum(z, 0.0)                                   # ReLU (VPU, f32)
    mean = jnp.sum(z, axis=0, keepdims=True) * inv_n
    zc = z - mean
    var = jnp.sum(zc * zc, axis=0, keepdims=True) * inv_n     # biased variance
    scale = p[1:2, :] * lax.rsqrt(var + EPS)                  # gamma/sqrt(var+eps)
    return zc, scale, p[2:3, :]


def dnn_kernel(x_ref,
               w1_ref, p1_ref, w2_ref, p2_ref,
               w3_ref, p3_ref, w4_ref, p4_ref,
               out_ref):
    """(linear -> relu -> batchnorm) x4 -> fc5, single invocation (no grid)."""
    inv_n = 1.0 / x_ref.shape[0]

    h = x_ref[...]                                            # (batch, 800) bf16
    for w_ref, p_ref in ((w1_ref, p1_ref), (w2_ref, p2_ref), (w3_ref, p3_ref)):
        zc, sc, be = _layer_core(h, w_ref, p_ref, inv_n)
        h = (zc * sc + be).astype(jnp.bfloat16)               # folded BN scale/shift

    # Layer 4 with fc5 folded into its BN epilogue.
    zc4, sc4, be4 = _layer_core(h, w4_ref, p4_ref, inv_n)
    w5 = p4_ref[3:4, :]                                       # (1, 10)
    b5 = p4_ref[4:5, 0:1]                                     # (1, 1)
    w_eff = w5 * sc4                                          # fc5 weight * BN scale
    b_eff = jnp.sum(w5 * be4, axis=-1, keepdims=True) + b5    # scalar shift
    # (1,10) . (batch,10)^T -> (1, batch): lane-dense output row (batch on lanes).
    y_row = lax.dot_general(w_eff, zc4, (((1,), (1,)), ((), ())),
                            preferred_element_type=jnp.float32) + b_eff
    out_ref[...] = y_row


def _full_spec(a):
    nd = a.ndim
    return pl.BlockSpec(a.shape, lambda *_a, _nd=nd: (0,) * _nd)


def _cost_estimate(batch):
    dims = _DIMS + (1,)
    flops = 2 * batch * sum(a * b for a, b in zip(dims[:-1], dims[1:]))
    io_bytes = 2 * batch * INPUT_SIZE + 4 * batch             # bf16 x in, f32 y out
    return pl.CostEstimate(
        flops=flops,
        transcendentals=sum(HIDDEN),                          # one rsqrt per BN feature
        bytes_accessed=_W_BYTES + _P_BYTES + io_bytes,
    )


def dnn_forward(x, params):
    """x: (batch, 800). params = (w1, p1, ..., w4, p4). Returns (batch, 1) f32."""
    batch = x.shape[0]

    # Rough resident footprint of the single-block (no-grid) design.
    need = (_W_BYTES + _P_BYTES + 2 * batch * INPUT_SIZE
            + 8 * batch * sum(HIDDEN) + 4 * batch)
    if 2 * need > _VMEM_CAP:
        # TODO(synk): batch-tiled two-pass BN path for VMEM-exceeding batches.
        raise NotImplementedError("batch too large for the single-block kernel")
    vmem_limit = int(min(max(2 * need + (2 << 20), 8 << 20), _VMEM_CAP))

    args = (x.astype(jnp.bfloat16),) + tuple(params)
    out_row = pl.pallas_call(
        dnn_kernel,
        out_shape=jax.ShapeDtypeStruct((1, batch), jnp.float32),
        in_specs=[_full_spec(a) for a in args],
        out_specs=pl.BlockSpec((1, batch), lambda: (0, 0)),
        compiler_params=pltpu.CompilerParams(vmem_limit_bytes=vmem_limit),
        cost_estimate=_cost_estimate(batch),
    )(*args)
    return out_row.reshape(batch, 1)


def init_params(key):
    """PyTorch-default-style init (uniform(+-1/sqrt(fan_in))).

    Per layer i in 1..3: w_i (fan_in, fan_out) bf16,
                         p_i (3, fan_out) f32 = [bias; gamma; beta].
    Layer 4:             w_4 (100, 10) bf16,
                         p_4 (5, 10)  f32 = [bias; gamma; beta; w5; b5-row].
    """
    params = []
    for i in range(4):
        fan_in, fan_out = _DIMS[i], _DIMS[i + 1]
        key, kw, kb = jax.random.split(key, 3)
        bound = 1.0 / math.sqrt(fan_in)
        w = jax.random.uniform(kw, (fan_in, fan_out), jnp.float32, -bound, bound)
        b = jax.random.uniform(kb, (fan_out,), jnp.float32, -bound, bound)
        rows = [b, jnp.ones((fan_out,), jnp.float32), jnp.zeros((fan_out,), jnp.float32)]
        if i == 3:  # fold fc5 (10 -> 1) params into the layer-4 pack
            key, kw5, kb5 = jax.random.split(key, 3)
            b5_bound = 1.0 / math.sqrt(fan_out)
            w5 = jax.random.uniform(kw5, (fan_out,), jnp.float32, -b5_bound, b5_bound)
            b5 = jax.random.uniform(kb5, (), jnp.float32, -b5_bound, b5_bound)
            rows += [w5, jnp.full((fan_out,), b5, jnp.float32)]
        params += [w.astype(jnp.bfloat16), jnp.stack(rows, axis=0)]
    return tuple(params)


def reference_forward(x, params):
    """Pure-JAX reference mirroring the kernel's dtype flow (bf16 matmul inputs)."""
    h = x.astype(jnp.bfloat16)
    hf = None
    for i in range(4):
        w, p = params[2 * i], params[2 * i + 1]
        b, gamma, beta = p[0:1, :], p[1:2, :], p[2:3, :]
        z = jnp.maximum(jnp.dot(h, w, preferred_element_type=jnp.float32) + b, 0.0)
        mean = jnp.mean(z, axis=0, keepdims=True)
        var = jnp.mean((z - mean) ** 2, axis=0, keepdims=True)   # biased
        hf = gamma * (z - mean) * lax.rsqrt(var + EPS) + beta
        h = hf.astype(jnp.bfloat16)
    p4 = params[7]
    w5, b5 = p4[3:4, :], p4[4, 0]
    return jnp.sum(hf * w5, axis=-1, keepdims=True) + b5


if __name__ == "__main__":
    key = jax.random.PRNGKey(0)
    key, kx = jax.random.split(key)

    batch = 8
    x = jax.random.normal(kx, (batch, INPUT_SIZE), dtype=jnp.float32)
    params = init_params(key)

    out = jax.block_until_ready(dnn_forward(x, params))
    ref = jax.block_until_ready(reference_forward(x, params))

    assert out.shape == (batch, 1), out.shape
    err = float(jnp.max(jnp.abs(out - ref)))
    assert jnp.allclose(out, ref, atol=5e-3, rtol=5e-3), f"max abs err = {err}"

    print("KERNEL_OK")
</pallas_src>

<mosaic_0001>
module attributes {stable_mosaic.version = 11 : i64} {
  func.func @dnn_kernel(%arg0: memref<8x800xbf16, #tpu.memory_space<vmem>>, %arg1: memref<800x500xbf16, #tpu.memory_space<vmem>>, %arg2: memref<3x500xf32, #tpu.memory_space<vmem>>, %arg3: memref<500x200xbf16, #tpu.memory_space<vmem>>, %arg4: memref<3x200xf32, #tpu.memory_space<vmem>>, %arg5: memref<200x100xbf16, #tpu.memory_space<vmem>>, %arg6: memref<3x100xf32, #tpu.memory_space<vmem>>, %arg7: memref<100x10xbf16, #tpu.memory_space<vmem>>, %arg8: memref<5x10xf32, #tpu.memory_space<vmem>>, %arg9: memref<1x8xf32, #tpu.memory_space<vmem>>) attributes {dimension_semantics = [], scalar_prefetch = 0 : i64, scratch_operands = 0 : i64, tpu.core_type = #tpu.core_type<tc>} {
    %c0 = arith.constant 0 : index
    %c0_0 = arith.constant 0 : index
    %0 = vector.load %arg0[%c0, %c0_0] : memref<8x800xbf16, #tpu.memory_space<vmem>>, vector<8x800xbf16>
    %c0_1 = arith.constant 0 : index
    %c0_2 = arith.constant 0 : index
    %1 = vector.load %arg2[%c0_1, %c0_2] : memref<3x500xf32, #tpu.memory_space<vmem>>, vector<3x500xf32>
    %c0_3 = arith.constant 0 : index
    %c0_4 = arith.constant 0 : index
    %2 = vector.load %arg1[%c0_3, %c0_4] : memref<800x500xbf16, #tpu.memory_space<vmem>>, vector<800x500xbf16>
    %cst = arith.constant dense<0.000000e+00> : vector<8x500xf32>
    %3 = tpu.matmul %0, %2, %cst {dimension_numbers = #tpu.dot_dimension_numbers<[1], [0], [0], [1], [0, 0, 1, 1], [], []>} : vector<8x800xbf16>, vector<800x500xbf16>, vector<8x500xf32> -> vector<8x500xf32>
    %4 = vector.extract_strided_slice %1 {offsets = [0, 0], sizes = [1, 500], strides = [1, 1]} : vector<3x500xf32> to vector<1x500xf32>
    %5 = vector.broadcast %4 : vector<1x500xf32> to vector<8x500xf32>
    %6 = arith.addf %3, %5 : vector<8x500xf32>
    %cst_5 = arith.constant 0.000000e+00 : f32
    %7 = vector.broadcast %cst_5 : f32 to vector<8x500xf32>
    %8 = arith.maximumf %6, %7 : vector<8x500xf32>
    %cst_6 = arith.constant dense<0.000000e+00> : vector<500xf32>
    %9 = vector.multi_reduction <add>, %8, %cst_6 [0] : vector<8x500xf32> to vector<500xf32>
    %10 = vector.shape_cast %9 : vector<500xf32> to vector<1x500xf32>
    %cst_7 = arith.constant 1.250000e-01 : f32
    %11 = vector.broadcast %cst_7 : f32 to vector<1x500xf32>
    %12 = arith.mulf %10, %11 : vector<1x500xf32>
    %13 = vector.broadcast %12 : vector<1x500xf32> to vector<8x500xf32>
    %14 = arith.subf %8, %13 : vector<8x500xf32>
    %15 = arith.mulf %14, %14 : vector<8x500xf32>
    %cst_8 = arith.constant dense<0.000000e+00> : vector<500xf32>
    %16 = vector.multi_reduction <add>, %15, %cst_8 [0] : vector<8x500xf32> to vector<500xf32>
    %17 = vector.shape_cast %16 : vector<500xf32> to vector<1x500xf32>
    %cst_9 = arith.constant 1.250000e-01 : f32
    %18 = vector.broadcast %cst_9 : f32 to vector<1x500xf32>
    %19 = arith.mulf %17, %18 : vector<1x500xf32>
    %20 = vector.extract_strided_slice %1 {offsets = [1, 0], sizes = [1, 500], strides = [1, 1]} : vector<3x500xf32> to vector<1x500xf32>
    %cst_10 = arith.constant 9.99999974E-6 : f32
    %21 = vector.broadcast %cst_10 : f32 to vector<1x500xf32>
    %22 = arith.addf %19, %21 : vector<1x500xf32>
    %23 = math.rsqrt %22 : vector<1x500xf32>
    %24 = arith.mulf %20, %23 : vector<1x500xf32>
    %25 = vector.extract_strided_slice %1 {offsets = [2, 0], sizes = [1, 500], strides = [1, 1]} : vector<3x500xf32> to vector<1x500xf32>
    %26 = vector.broadcast %24 : vector<1x500xf32> to vector<8x500xf32>
    %27 = arith.mulf %14, %26 : vector<8x500xf32>
    %28 = vector.broadcast %25 : vector<1x500xf32> to vector<8x500xf32>
    %29 = arith.addf %27, %28 : vector<8x500xf32>
    %30 = arith.truncf %29 : vector<8x500xf32> to vector<8x500xbf16>
    %c0_11 = arith.constant 0 : index
    %c0_12 = arith.constant 0 : index
    %31 = vector.load %arg4[%c0_11, %c0_12] : memref<3x200xf32, #tpu.memory_space<vmem>>, vector<3x200xf32>
    %c0_13 = arith.constant 0 : index
    %c0_14 = arith.constant 0 : index
    %32 = vector.load %arg3[%c0_13, %c0_14] : memref<500x200xbf16, #tpu.memory_space<vmem>>, vector<500x200xbf16>
    %cst_15 = arith.constant dense<0.000000e+00> : vector<8x200xf32>
    %33 = tpu.matmul %30, %32, %cst_15 {dimension_numbers = #tpu.dot_dimension_numbers<[1], [0], [0], [1], [0, 0, 1, 1], [], []>} : vector<8x500xbf16>, vector<500x200xbf16>, vector<8x200xf32> -> vector<8x200xf32>
    %34 = vector.extract_strided_slice %31 {offsets = [0, 0], sizes = [1, 200], strides = [1, 1]} : vector<3x200xf32> to vector<1x200xf32>
    %35 = vector.broadcast %34 : vector<1x200xf32> to vector<8x200xf32>
    %36 = arith.addf %33, %35 : vector<8x200xf32>
    %cst_16 = arith.constant 0.000000e+00 : f32
    %37 = vector.broadcast %cst_16 : f32 to vector<8x200xf32>
    %38 = arith.maximumf %36, %37 : vector<8x200xf32>
    %cst_17 = arith.constant dense<0.000000e+00> : vector<200xf32>
    %39 = vector.multi_reduction <add>, %38, %cst_17 [0] : vector<8x200xf32> to vector<200xf32>
    %40 = vector.shape_cast %39 : vector<200xf32> to vector<1x200xf32>
    %cst_18 = arith.constant 1.250000e-01 : f32
    %41 = vector.broadcast %cst_18 : f32 to vector<1x200xf32>
    %42 = arith.mulf %40, %41 : vector<1x200xf32>
    %43 = vector.broadcast %42 : vector<1x200xf32> to vector<8x200xf32>
    %44 = arith.subf %38, %43 : vector<8x200xf32>
    %45 = arith.mulf %44, %44 : vector<8x200xf32>
    %cst_19 = arith.constant dense<0.000000e+00> : vector<200xf32>
    %46 = vector.multi_reduction <add>, %45, %cst_19 [0] : vector<8x200xf32> to vector<200xf32>
    %47 = vector.shape_cast %46 : vector<200xf32> to vector<1x200xf32>
    %cst_20 = arith.constant 1.250000e-01 : f32
    %48 = vector.broadcast %cst_20 : f32 to vector<1x200xf32>
    %49 = arith.mulf %47, %48 : vector<1x200xf32>
    %50 = vector.extract_strided_slice %31 {offsets = [1, 0], sizes = [1, 200], strides = [1, 1]} : vector<3x200xf32> to vector<1x200xf32>
    %cst_21 = arith.constant 9.99999974E-6 : f32
    %51 = vector.broadcast %cst_21 : f32 to vector<1x200xf32>
    %52 = arith.addf %49, %51 : vector<1x200xf32>
    %53 = math.rsqrt %52 : vector<1x200xf32>
    %54 = arith.mulf %50, %53 : vector<1x200xf32>
    %55 = vector.extract_strided_slice %31 {offsets = [2, 0], sizes = [1, 200], strides = [1, 1]} : vector<3x200xf32> to vector<1x200xf32>
    %56 = vector.broadcast %54 : vector<1x200xf32> to vector<8x200xf32>
    %57 = arith.mulf %44, %56 : vector<8x200xf32>
    %58 = vector.broadcast %55 : vector<1x200xf32> to vector<8x200xf32>
    %59 = arith.addf %57, %58 : vector<8x200xf32>
    %60 = arith.truncf %59 : vector<8x200xf32> to vector<8x200xbf16>
    %c0_22 = arith.constant 0 : index
    %c0_23 = arith.constant 0 : index
    %61 = vector.load %arg6[%c0_22, %c0_23] : memref<3x100xf32, #tpu.memory_space<vmem>>, vector<3x100xf32>
    %c0_24 = arith.constant 0 : index
    %c0_25 = arith.constant 0 : index
    %62 = vector.load %arg5[%c0_24, %c0_25] : memref<200x100xbf16, #tpu.memory_space<vmem>>, vector<200x100xbf16>
    %cst_26 = arith.constant dense<0.000000e+00> : vector<8x100xf32>
    %63 = tpu.matmul %60, %62, %cst_26 {dimension_numbers = #tpu.dot_dimension_numbers<[1], [0], [0], [1], [0, 0, 1, 1], [], []>} : vector<8x200xbf16>, vector<200x100xbf16>, vector<8x100xf32> -> vector<8x100xf32>
    %64 = vector.extract_strided_slice %61 {offsets = [0, 0], sizes = [1, 100], strides = [1, 1]} : vector<3x100xf32> to vector<1x100xf32>
    %65 = vector.broadcast %64 : vector<1x100xf32> to vector<8x100xf32>
    %66 = arith.addf %63, %65 : vector<8x100xf32>
    %cst_27 = arith.constant 0.000000e+00 : f32
    %67 = vector.broadcast %cst_27 : f32 to vector<8x100xf32>
    %68 = arith.maximumf %66, %67 : vector<8x100xf32>
    %cst_28 = arith.constant dense<0.000000e+00> : vector<100xf32>
    %69 = vector.multi_reduction <add>, %68, %cst_28 [0] : vector<8x100xf32> to vector<100xf32>
    %70 = vector.shape_cast %69 : vector<100xf32> to vector<1x100xf32>
    %cst_29 = arith.constant 1.250000e-01 : f32
    %71 = vector.broadcast %cst_29 : f32 to vector<1x100xf32>
    %72 = arith.mulf %70, %71 : vector<1x100xf32>
    %73 = vector.broadcast %72 : vector<1x100xf32> to vector<8x100xf32>
    %74 = arith.subf %68, %73 : vector<8x100xf32>
    %75 = arith.mulf %74, %74 : vector<8x100xf32>
    %cst_30 = arith.constant dense<0.000000e+00> : vector<100xf32>
    %76 = vector.multi_reduction <add>, %75, %cst_30 [0] : vector<8x100xf32> to vector<100xf32>
    %77 = vector.shape_cast %76 : vector<100xf32> to vector<1x100xf32>
    %cst_31 = arith.constant 1.250000e-01 : f32
    %78 = vector.broadcast %cst_31 : f32 to vector<1x100xf32>
    %79 = arith.mulf %77, %78 : vector<1x100xf32>
    %80 = vector.extract_strided_slice %61 {offsets = [1, 0], sizes = [1, 100], strides = [1, 1]} : vector<3x100xf32> to vector<1x100xf32>
    %cst_32 = arith.constant 9.99999974E-6 : f32
    %81 = vector.broadcast %cst_32 : f32 to vector<1x100xf32>
    %82 = arith.addf %79, %81 : vector<1x100xf32>
    %83 = math.rsqrt %82 : vector<1x100xf32>
    %84 = arith.mulf %80, %83 : vector<1x100xf32>
    %85 = vector.extract_strided_slice %61 {offsets = [2, 0], sizes = [1, 100], strides = [1, 1]} : vector<3x100xf32> to vector<1x100xf32>
    %86 = vector.broadcast %84 : vector<1x100xf32> to vector<8x100xf32>
    %87 = arith.mulf %74, %86 : vector<8x100xf32>
    %88 = vector.broadcast %85 : vector<1x100xf32> to vector<8x100xf32>
    %89 = arith.addf %87, %88 : vector<8x100xf32>
    %90 = arith.truncf %89 : vector<8x100xf32> to vector<8x100xbf16>
    %c0_33 = arith.constant 0 : index
    %c0_34 = arith.constant 0 : index
    %91 = vector.load %arg8[%c0_33, %c0_34] : memref<5x10xf32, #tpu.memory_space<vmem>>, vector<5x10xf32>
    %c0_35 = arith.constant 0 : index
    %c0_36 = arith.constant 0 : index
    %92 = vector.load %arg7[%c0_35, %c0_36] : memref<100x10xbf16, #tpu.memory_space<vmem>>, vector<100x10xbf16>
    %cst_37 = arith.constant dense<0.000000e+00> : vector<8x10xf32>
    %93 = tpu.matmul %90, %92, %cst_37 {dimension_numbers = #tpu.dot_dimension_numbers<[1], [0], [0], [1], [0, 0, 1, 1], [], []>} : vector<8x100xbf16>, vector<100x10xbf16>, vector<8x10xf32> -> vector<8x10xf32>
    %94 = vector.extract_strided_slice %91 {offsets = [0, 0], sizes = [1, 10], strides = [1, 1]} : vector<5x10xf32> to vector<1x10xf32>
    %95 = vector.broadcast %94 : vector<1x10xf32> to vector<8x10xf32>
    %96 = arith.addf %93, %95 : vector<8x10xf32>
    %cst_38 = arith.constant 0.000000e+00 : f32
    %97 = vector.broadcast %cst_38 : f32 to vector<8x10xf32>
    %98 = arith.maximumf %96, %97 : vector<8x10xf32>
    %cst_39 = arith.constant dense<0.000000e+00> : vector<10xf32>
    %99 = vector.multi_reduction <add>, %98, %cst_39 [0] : vector<8x10xf32> to vector<10xf32>
    %100 = vector.shape_cast %99 : vector<10xf32> to vector<1x10xf32>
    %cst_40 = arith.constant 1.250000e-01 : f32
    %101 = vector.broadcast %cst_40 : f32 to vector<1x10xf32>
    %102 = arith.mulf %100, %101 : vector<1x10xf32>
    %103 = vector.broadcast %102 : vector<1x10xf32> to vector<8x10xf32>
    %104 = arith.subf %98, %103 : vector<8x10xf32>
    %105 = arith.mulf %104, %104 : vector<8x10xf32>
    %cst_41 = arith.constant dense<0.000000e+00> : vector<10xf32>
    %106 = vector.multi_reduction <add>, %105, %cst_41 [0] : vector<8x10xf32> to vector<10xf32>
    %107 = vector.shape_cast %106 : vector<10xf32> to vector<1x10xf32>
    %cst_42 = arith.constant 1.250000e-01 : f32
    %108 = vector.broadcast %cst_42 : f32 to vector<1x10xf32>
    %109 = arith.mulf %107, %108 : vector<1x10xf32>
    %110 = vector.extract_strided_slice %91 {offsets = [1, 0], sizes = [1, 10], strides = [1, 1]} : vector<5x10xf32> to vector<1x10xf32>
    %cst_43 = arith.constant 9.99999974E-6 : f32
    %111 = vector.broadcast %cst_43 : f32 to vector<1x10xf32>
    %112 = arith.addf %109, %111 : vector<1x10xf32>
    %113 = math.rsqrt %112 : vector<1x10xf32>
    %114 = arith.mulf %110, %113 : vector<1x10xf32>
    %115 = vector.extract_strided_slice %91 {offsets = [2, 0], sizes = [1, 10], strides = [1, 1]} : vector<5x10xf32> to vector<1x10xf32>
    %c3 = arith.constant 3 : index
    %c0_44 = arith.constant 0 : index
    %116 = vector.load %arg8[%c3, %c0_44] : memref<5x10xf32, #tpu.memory_space<vmem>>, vector<1x10xf32>
    %c4 = arith.constant 4 : index
    %c0_45 = arith.constant 0 : index
    %117 = vector.load %arg8[%c4, %c0_45] : memref<5x10xf32, #tpu.memory_space<vmem>>, vector<1x1xf32>
    %118 = arith.mulf %116, %114 : vector<1x10xf32>
    %119 = arith.mulf %116, %115 : vector<1x10xf32>
    %cst_46 = arith.constant dense<0.000000e+00> : vector<1xf32>
    %120 = vector.multi_reduction <add>, %119, %cst_46 [1] : vector<1x10xf32> to vector<1xf32>
    %121 = vector.shape_cast %120 : vector<1xf32> to vector<1x1xf32>
    %122 = arith.addf %121, %117 : vector<1x1xf32>
    %cst_47 = arith.constant dense<0.000000e+00> : vector<1x8xf32>
    %123 = tpu.matmul %118, %104, %cst_47 {dimension_numbers = #tpu.dot_dimension_numbers<[1], [1], [0], [0], [0, 0, 1, 0], [], []>} : vector<1x10xf32>, vector<8x10xf32>, vector<1x8xf32> -> vector<1x8xf32>
    %124 = vector.broadcast %122 : vector<1x1xf32> to vector<1x8xf32>
    %125 = arith.addf %123, %124 : vector<1x8xf32>
    %c0_48 = arith.constant 0 : index
    %c0_49 = arith.constant 0 : index
    %126 = vector.load %arg9[%c0_48, %c0_49] : memref<1x8xf32, #tpu.memory_space<vmem>>, vector<1x8xf32>
    tpu.vector_store %arg9[%c0_48, %c0_49], %125 {strides = array<i32>} : memref<1x8xf32, #tpu.memory_space<vmem>>, vector<1x8xf32>,
    return
  }
}

</mosaic_0001>

<llo_original>
// kernel: tpu_custom_call.1
$region0: #{tpu_custom_call.1}
  #allocation0 [shape = 'u32[]', space=smem, size = 0x4, offset = 0x4, fixed_abs, tag = 'smem constant byte address 0x4 - core index']
  #allocation1 [shape = 'u32[144,128]{1,0:T(1,128)}', space=vmem, size = 0x12000, scoped, tag = 'internal scratch']
  %s0 = inlined_call_operand.vmem [shape: bf16[8,800], index: 0, kind: input, shape index: {}]
  %s1 = inlined_call_operand.hbm [shape: bf16[800,500], index: 1, kind: input, shape index: {}]
  %s2 = inlined_call_operand.vmem [shape: f32[3,500], index: 2, kind: input, shape index: {}]
  %s3 = inlined_call_operand.vmem [shape: bf16[500,200], index: 3, kind: input, shape index: {}]
  %s4 = inlined_call_operand.vmem [shape: f32[3,200], index: 4, kind: input, shape index: {}]
  %s5 = inlined_call_operand.vmem [shape: bf16[200,100], index: 5, kind: input, shape index: {}]
  %s6 = inlined_call_operand.vmem [shape: f32[3,100], index: 6, kind: input, shape index: {}]
  %s7 = inlined_call_operand.vmem [shape: bf16[100,10], index: 7, kind: input, shape index: {}]
  %s8 = inlined_call_operand.vmem [shape: f32[5,10], index: 8, kind: input, shape index: {}]
  %s9 = inlined_call_operand.hbm [shape: f32[1,8], index: 9, kind: output, shape index: {}]
  %s10 = sld [smem:[#allocation0]]
  $region50: #{tpu_custom_call.1} parent=0
    _
  %s12 = ssub.s32 1, %s10
  %s13 = scalar_select 0, %s12, %s10
  $region1: #{tpu_custom_call.1} parent=0
    #allocation2 [shape = 'u8[819200]{0}', space=vmem, size = 0xc8000, scoped, tag = 'input window, operand 1, single buffered']
    #allocation3 [shape = 's32[1]{0}', space=sflag, size = 0x4, scoped, tag = 'scoped memory for tpu_custom_call.1']
    #allocation4 [shape = 's32[1]{0}', space=sflag, size = 0x4, scoped, tag = 'scoped memory for tpu_custom_call.1']
    #allocation5 [shape = 'u8[512]{0}', space=vmem, size = 0x400, scoped, tag = 'output window, operand 0, single buffered']
    %14 = vsyncpa [#allocation3], 0
    %15 = vsyncpa [#allocation4], 0
    // Predicated region
    $region2: #{tpu_custom_call.1} parent=1 // pred_check
      _
    $region3: #{tpu_custom_call.1} parent=1 // pred_check_branch
      %17 = sbr.rel (0) target = $region5
    $region4: #{tpu_custom_call.1} parent=1 // pred_region
      _
    $region5: #{tpu_custom_call.1} parent=1 // pred_fallthru
      _
    // Predicated region
    $region6: #{tpu_custom_call.1} parent=1 // pred_check
      _
    $region7: #{tpu_custom_call.1} parent=1 // pred_check_branch
      %19 = sbr.rel (0) target = $region9
    $region8: #{tpu_custom_call.1} parent=1 // pred_region
      %s21 = ssub.s32 25600, 25600
      %22 = vsyncadd [#allocation3], %s21
      %s23 = sshll.u32 [#allocation2], 4
      %s24 = int_to_ptr.vmem [resolvable:$true] %s23
      %29 = dma.hbm_to_vmem [thread:$0]  %s1, 25600, %s24, [#allocation3], 256, 256, 16
    $region9: #{tpu_custom_call.1} parent=1 // pred_fallthru
      _
    // Predicated region
    $region10: #{tpu_custom_call.1} parent=1 // pred_check
      _
    $region11: #{tpu_custom_call.1} parent=1 // pred_check_branch
      %31 = sbr.rel (0) target = $region13
    $region12: #{tpu_custom_call.1} parent=1 // pred_region
      _
    $region13: #{tpu_custom_call.1} parent=1 // pred_fallthru
      _
    // Predicated region
    $region14: #{tpu_custom_call.1} parent=1 // pred_check
      _
    $region15: #{tpu_custom_call.1} parent=1 // pred_check_branch
      %33 = sbr.rel (0) target = $region17
    $region16: #{tpu_custom_call.1} parent=1 // pred_region
      _
    $region17: #{tpu_custom_call.1} parent=1 // pred_fallthru
      _
    // Predicated region
    $region18: #{tpu_custom_call.1} parent=1 // pred_check
      _
    $region19: #{tpu_custom_call.1} parent=1 // pred_check_branch
      %35 = sbr.rel (0) target = $region21
    $region20: #{tpu_custom_call.1} parent=1 // pred_region
      _
    $region21: #{tpu_custom_call.1} parent=1 // pred_fallthru
      _
    // Predicated region
    $region22: #{tpu_custom_call.1} parent=1 // pred_check
      _
    $region23: #{tpu_custom_call.1} parent=1 // pred_check_branch
      %37 = sbr.rel (0) target = $region25
    $region24: #{tpu_custom_call.1} parent=1 // pred_region
      _
    $region25: #{tpu_custom_call.1} parent=1 // pred_fallthru
      _
    // Predicated region
    $region26: #{tpu_custom_call.1} parent=1 // pred_check
      _
    $region27: #{tpu_custom_call.1} parent=1 // pred_check_branch
      %39 = sbr.rel (0) target = $region29
    $region28: #{tpu_custom_call.1} parent=1 // pred_region
      _
    $region29: #{tpu_custom_call.1} parent=1 // pred_fallthru
      _
    // Predicated region
    $region30: #{tpu_custom_call.1} parent=1 // pred_check
      _
    $region31: #{tpu_custom_call.1} parent=1 // pred_check_branch
      %41 = sbr.rel (0) target = $region33
    $region32: #{tpu_custom_call.1} parent=1 // pred_region
      _
    $region33: #{tpu_custom_call.1} parent=1 // pred_fallthru
      _
    // Predicated region
    $region34: #{tpu_custom_call.1} parent=1 // pred_check
      _
    $region35: #{tpu_custom_call.1} parent=1 // pred_check_branch
      %43 = sbr.rel (0) target = $region37
    $region36: #{tpu_custom_call.1} parent=1 // pred_region
      _
    $region37: #{tpu_custom_call.1} parent=1 // pred_fallthru
      _
    // Predicated region
    $region38: #{tpu_custom_call.1} parent=1 // pred_check
      _
    $region39: #{tpu_custom_call.1} parent=1 // pred_check_branch
      %45 = sbr.rel (0) target = $region41
    $region40: #{tpu_custom_call.1} parent=1 // pred_region
      %46 = dma.done [#allocation3], 25600
    $region41: #{tpu_custom_call.1} parent=1 // pred_fallthru
      _
    %v48 = vld [vmem:[%s0] sm:$0xff]
    %v49 = vld [vmem:[%s0 + $0x8] sm:$0xff]
    %v50 = vld [vmem:[%s0 + $0x10] sm:$0xff]
    %v51 = vld [vmem:[%s0 + $0x18] sm:$0xf]
    %v52 = vld [vmem:[%s2] sm:$0x77]
    %v53 = vld [vmem:[%s2 + $0x8] sm:$0x77]
    %v54 = vld [vmem:[#allocation2] sm:$0xff]
    %v55 = vld [vmem:[#allocation2 + $0x8] sm:$0xff]
    %v56 = vld [vmem:[#allocation2 + $0x10] sm:$0xff]
    %v57 = vld [vmem:[#allocation2 + $0x18] sm:$0xff]
    %v58 = vld [vmem:[#allocation2 + $0x20] sm:$0xff]
    %v59 = vld [vmem:[#allocation2 + $0x28] sm:$0xff]
    %v60 = vld [vmem:[#allocation2 + $0x30] sm:$0xff]
    %v61 = vld [vmem:[#allocation2 + $0x38] sm:$0xff]
    %v62 = vld [vmem:[#allocation2 + $0x40] sm:$0xff]
    %v63 = vld [vmem:[#allocation2 + $0x48] sm:$0xff]
    %v64 = vld [vmem:[#allocation2 + $0x50] sm:$0xff]
    %v65 = vld [vmem:[#allocation2 + $0x58] sm:$0xff]
    %v66 = vld [vmem:[#allocation2 + $0x60] sm:$0xff]
    %v67 = vld [vmem:[#allocation2 + $0x68] sm:$0xff]
    %v68 = vld [vmem:[#allocation2 + $0x70] sm:$0xff]
    %v69 = vld [vmem:[#allocation2 + $0x78] sm:$0xff]
    %v70 = vld [vmem:[#allocation2 + $0x80] sm:$0xff]
    %v71 = vld [vmem:[#allocation2 + $0x88] sm:$0xff]
    %v72 = vld [vmem:[#allocation2 + $0x90] sm:$0xff]
    %v73 = vld [vmem:[#allocation2 + $0x98] sm:$0xff]
    %v74 = vld [vmem:[#allocation2 + $0xa0] sm:$0xff]
    %v75 = vld [vmem:[#allocation2 + $0xa8] sm:$0xff]
    %v76 = vld [vmem:[#allocation2 + $0xb0] sm:$0xff]
    %v77 = vld [vmem:[#allocation2 + $0xb8] sm:$0xff]
    %v78 = vld [vmem:[#allocation2 + $0xc0] sm:$0xff]
    %v79 = vld [vmem:[#allocation2 + $0xc8] sm:$0xff]
    %v80 = vld [vmem:[#allocation2 + $0xd0] sm:$0xff]
    %v81 = vld [vmem:[#allocation2 + $0xd8] sm:$0xff]
    %v82 = vld [vmem:[#allocation2 + $0xe0] sm:$0xff]
    %v83 = vld [vmem:[#allocation2 + $0xe8] sm:$0xff]
    %v84 = vld [vmem:[#allocation2 + $0xf0] sm:$0xff]
    %v85 = vld [vmem:[#allocation2 + $0xf8] sm:$0xff]
    %v86 = vld [vmem:[#allocation2 + $0x100] sm:$0xff]
    %v87 = vld [vmem:[#allocation2 + $0x108] sm:$0xff]
    %v88 = vld [vmem:[#allocation2 + $0x110] sm:$0xff]
    %v89 = vld [vmem:[#allocation2 + $0x118] sm:$0xff]
    %v90 = vld [vmem:[#allocation2 + $0x120] sm:$0xff]
    %v91 = vld [vmem:[#allocation2 + $0x128] sm:$0xff]
    %v92 = vld [vmem:[#allocation2 + $0x130] sm:$0xff]
    %v93 = vld [vmem:[#allocation2 + $0x138] sm:$0xff]
    %v94 = vld [vmem:[#allocation2 + $0x140] sm:$0xff]
    %v95 = vld [vmem:[#allocation2 + $0x148] sm:$0xff]
    %v96 = vld [vmem:[#allocation2 + $0x150] sm:$0xff]
    %v97 = vld [vmem:[#allocation2 + $0x158] sm:$0xff]
    %v98 = vld [vmem:[#allocation2 + $0x160] sm:$0xff]
    %v99 = vld [vmem:[#allocation2 + $0x168] sm:$0xff]
    %v100 = vld [vmem:[#allocation2 + $0x170] sm:$0xff]
    %v101 = vld [vmem:[#allocation2 + $0x178] sm:$0xff]
    %v102 = vld [vmem:[#allocation2 + $0x180] sm:$0xff]
    %v103 = vld [vmem:[#allocation2 + $0x188] sm:$0xff]
    %v104 = vld [vmem:[#allocation2 + $0x190] sm:$0xff]
    %v105 = vld [vmem:[#allocation2 + $0x198] sm:$0xff]
    %v106 = vld [vmem:[#allocation2 + $0x1a0] sm:$0xff]
    %v107 = vld [vmem:[#allocation2 + $0x1a8] sm:$0xff]
    %v108 = vld [vmem:[#allocation2 + $0x1b0] sm:$0xff]
    %v109 = vld [vmem:[#allocation2 + $0x1b8] sm:$0xff]
    %v110 = vld [vmem:[#allocation2 + $0x1c0] sm:$0xff]
    %v111 = vld [vmem:[#allocation2 + $0x1c8] sm:$0xff]
    %v112 = vld [vmem:[#allocation2 + $0x1d0] sm:$0xff]
    %v113 = vld [vmem:[#allocation2 + $0x1d8] sm:$0xff]
    %v114 = vld [vmem:[#allocation2 + $0x1e0] sm:$0xff]
    %v115 = vld [vmem:[#allocation2 + $0x1e8] sm:$0xff]
    %v116 = vld [vmem:[#allocation2 + $0x1f0] sm:$0xff]
    %v117 = vld [vmem:[#allocation2 + $0x1f8] sm:$0xff]
    %v118 = vld [vmem:[#allocation2 + $0x200] sm:$0xff]
    %v119 = vld [vmem:[#allocation2 + $0x208] sm:$0xff]
    %v120 = vld [vmem:[#allocation2 + $0x210] sm:$0xff]
    %v121 = vld [vmem:[#allocation2 + $0x218] sm:$0xff]
    %v122 = vld [vmem:[#allocation2 + $0x220] sm:$0xff]
    %v123 = vld [vmem:[#allocation2 + $0x228] sm:$0xff]
    %v124 = vld [vmem:[#allocation2 + $0x230] sm:$0xff]
    %v125 = vld [vmem:[#allocation2 + $0x238] sm:$0xff]
    %v126 = vld [vmem:[#allocation2 + $0x240] sm:$0xff]
    %v127 = vld [vmem:[#allocation2 + $0x248] sm:$0xff]
    %v128 = vld [vmem:[#allocation2 + $0x250] sm:$0xff]
    %v129 = vld [vmem:[#allocation2 + $0x258] sm:$0xff]
    %v130 = vld [vmem:[#allocation2 + $0x260] sm:$0xff]
    %v131 = vld [vmem:[#allocation2 + $0x268] sm:$0xff]
    %v132 = vld [vmem:[#allocation2 + $0x270] sm:$0xff]
    %v133 = vld [vmem:[#allocation2 + $0x278] sm:$0xff]
    %v134 = vld [vmem:[#allocation2 + $0x280] sm:$0xff]
    %v135 = vld [vmem:[#allocation2 + $0x288] sm:$0xff]
    %v136 = vld [vmem:[#allocation2 + $0x290] sm:$0xff]
    %v137 = vld [vmem:[#allocation2 + $0x298] sm:$0xff]
    %v138 = vld [vmem:[#allocation2 + $0x2a0] sm:$0xff]
    %v139 = vld [vmem:[#allocation2 + $0x2a8] sm:$0xff]
    %v140 = vld [vmem:[#allocation2 + $0x2b0] sm:$0xff]
    %v141 = vld [vmem:[#allocation2 + $0x2b8] sm:$0xff]
    %v142 = vld [vmem:[#allocation2 + $0x2c0] sm:$0xff]
    %v143 = vld [vmem:[#allocation2 + $0x2c8] sm:$0xff]
    %v144 = vld [vmem:[#allocation2 + $0x2d0] sm:$0xff]
    %v145 = vld [vmem:[#allocation2 + $0x2d8] sm:$0xff]
    %v146 = vld [vmem:[#allocation2 + $0x2e0] sm:$0xff]
    %v147 = vld [vmem:[#allocation2 + $0x2e8] sm:$0xff]
    %v148 = vld [vmem:[#allocation2 + $0x2f0] sm:$0xff]
    %v149 = vld [vmem:[#allocation2 + $0x2f8] sm:$0xff]
    %v150 = vld [vmem:[#allocation2 + $0x300] sm:$0xff]
    %v151 = vld [vmem:[#allocation2 + $0x308] sm:$0xff]
    %v152 = vld [vmem:[#allocation2 + $0x310] sm:$0xff]
    %v153 = vld [vmem:[#allocation2 + $0x318] sm:$0xff]
    %v154 = vld [vmem:[#allocation2 + $0x320] sm:$0xff]
    %v155 = vld [vmem:[#allocation2 + $0x328] sm:$0xff]
    %v156 = vld [vmem:[#allocation2 + $0x330] sm:$0xff]
    %v157 = vld [vmem:[#allocation2 + $0x338] sm:$0xff]
    %v158 = vld [vmem:[#allocation2 + $0x340] sm:$0xff]
    %v159 = vld [vmem:[#allocation2 + $0x348] sm:$0xff]
    %v160 = vld [vmem:[#allocation2 + $0x350] sm:$0xff]
    %v161 = vld [vmem:[#allocation2 + $0x358] sm:$0xff]
    %v162 = vld [vmem:[#allocation2 + $0x360] sm:$0xff]
    %v163 = vld [vmem:[#allocation2 + $0x368] sm:$0xff]
    %v164 = vld [vmem:[#allocation2 + $0x370] sm:$0xff]
    %v165 = vld [vmem:[#allocation2 + $0x378] sm:$0xff]
    %v166 = vld [vmem:[#allocation2 + $0x380] sm:$0xff]
    %v167 = vld [vmem:[#allocation2 + $0x388] sm:$0xff]
    %v168 = vld [vmem:[#allocation2 + $0x390] sm:$0xff]
    %v169 = vld [vmem:[#allocation2 + $0x398] sm:$0xff]
    %v170 = vld [vmem:[#allocation2 + $0x3a0] sm:$0xff]
    %v171 = vld [vmem:[#allocation2 + $0x3a8] sm:$0xff]
    %v172 = vld [vmem:[#allocation2 + $0x3b0] sm:$0xff]
    %v173 = vld [vmem:[#allocation2 + $0x3b8] sm:$0xff]
    %v174 = vld [vmem:[#allocation2 + $0x3c0] sm:$0xff]
    %v175 = vld [vmem:[#allocation2 + $0x3c8] sm:$0xff]
    %v176 = vld [vmem:[#allocation2 + $0x3d0] sm:$0xff]
    %v177 = vld [vmem:[#allocation2 + $0x3d8] sm:$0xff]
    %v178 = vld [vmem:[#allocation2 + $0x3e0] sm:$0xff]
    %v179 = vld [vmem:[#allocation2 + $0x3e8] sm:$0xff]
    %v180 = vld [vmem:[#allocation2 + $0x3f0] sm:$0xff]
    %v181 = vld [vmem:[#allocation2 + $0x3f8] sm:$0xff]
    %v182 = vld [vmem:[#allocation2 + $0x400] sm:$0xff]
    %v183 = vld [vmem:[#allocation2 + $0x408] sm:$0xff]
    %v184 = vld [vmem:[#allocation2 + $0x410] sm:$0xff]
    %v185 = vld [vmem:[#allocation2 + $0x418] sm:$0xff]
    %v186 = vld [vmem:[#allocation2 + $0x420] sm:$0xff]
    %v187 = vld [vmem:[#allocation2 + $0x428] sm:$0xff]
    %v188 = vld [vmem:[#allocation2 + $0x430] sm:$0xff]
    %v189 = vld [vmem:[#allocation2 + $0x438] sm:$0xff]
    %v190 = vld [vmem:[#allocation2 + $0x440] sm:$0xff]
    %v191 = vld [vmem:[#allocation2 + $0x448] sm:$0xff]
    %v192 = vld [vmem:[#allocation2 + $0x450] sm:$0xff]
    %v193 = vld [vmem:[#allocation2 + $0x458] sm:$0xff]
    %v194 = vld [vmem:[#allocation2 + $0x460] sm:$0xff]
    %v195 = vld [vmem:[#allocation2 + $0x468] sm:$0xff]
    %v196 = vld [vmem:[#allocation2 + $0x470] sm:$0xff]
    %v197 = vld [vmem:[#allocation2 + $0x478] sm:$0xff]
    %v198 = vld [vmem:[#allocation2 + $0x480] sm:$0xff]
    %v199 = vld [vmem:[#allocation2 + $0x488] sm:$0xff]
    %v200 = vld [vmem:[#allocation2 + $0x490] sm:$0xff]
    %v201 = vld [vmem:[#allocation2 + $0x498] sm:$0xff]
    %v202 = vld [vmem:[#allocation2 + $0x4a0] sm:$0xff]
    %v203 = vld [vmem:[#allocation2 + $0x4a8] sm:$0xff]
    %v204 = vld [vmem:[#allocation2 + $0x4b0] sm:$0xff]
    %v205 = vld [vmem:[#allocation2 + $0x4b8] sm:$0xff]
    %v206 = vld [vmem:[#allocation2 + $0x4c0] sm:$0xff]
    %v207 = vld [vmem:[#allocation2 + $0x4c8] sm:$0xff]
    %v208 = vld [vmem:[#allocation2 + $0x4d0] sm:$0xff]
    %v209 = vld [vmem:[#allocation2 + $0x4d8] sm:$0xff]
    %v210 = vld [vmem:[#allocation2 + $0x4e0] sm:$0xff]
    %v211 = vld [vmem:[#allocation2 + $0x4e8] sm:$0xff]
    %v212 = vld [vmem:[#allocation2 + $0x4f0] sm:$0xff]
    %v213 = vld [vmem:[#allocation2 + $0x4f8] sm:$0xff]
    %v214 = vld [vmem:[#allocation2 + $0x500] sm:$0xff]
    %v215 = vld [vmem:[#allocation2 + $0x508] sm:$0xff]
    %v216 = vld [vmem:[#allocation2 + $0x510] sm:$0xff]
    %v217 = vld [vmem:[#allocation2 + $0x518] sm:$0xff]
    %v218 = vld [vmem:[#allocation2 + $0x520] sm:$0xff]
    %v219 = vld [vmem:[#allocation2 + $0x528] sm:$0xff]
    %v220 = vld [vmem:[#allocation2 + $0x530] sm:$0xff]
    %v221 = vld [vmem:[#allocation2 + $0x538] sm:$0xff]
    %v222 = vld [vmem:[#allocation2 + $0x540] sm:$0xff]
    %v223 = vld [vmem:[#allocation2 + $0x548] sm:$0xff]
    %v224 = vld [vmem:[#allocation2 + $0x550] sm:$0xff]
    %v225 = vld [vmem:[#allocation2 + $0x558] sm:$0xff]
    %v226 = vld [vmem:[#allocation2 + $0x560] sm:$0xff]
    %v227 = vld [vmem:[#allocation2 + $0x568] sm:$0xff]
    %v228 = vld [vmem:[#allocation2 + $0x570] sm:$0xff]
    %v229 = vld [vmem:[#allocation2 + $0x578] sm:$0xff]
    %v230 = vld [vmem:[#allocation2 + $0x580] sm:$0xff]
    %v231 = vld [vmem:[#allocation2 + $0x588] sm:$0xff]
    %v232 = vld [vmem:[#allocation2 + $0x590] sm:$0xff]
    %v233 = vld [vmem:[#allocation2 + $0x598] sm:$0xff]
    %v234 = vld [vmem:[#allocation2 + $0x5a0] sm:$0xff]
    %v235 = vld [vmem:[#allocation2 + $0x5a8] sm:$0xff]
    %v236 = vld [vmem:[#allocation2 + $0x5b0] sm:$0xff]
    %v237 = vld [vmem:[#allocation2 + $0x5b8] sm:$0xff]
    %v238 = vld [vmem:[#allocation2 + $0x5c0] sm:$0xff]
    %v239 = vld [vmem:[#allocation2 + $0x5c8] sm:$0xff]
    %v240 = vld [vmem:[#allocation2 + $0x5d0] sm:$0xff]
    %v241 = vld [vmem:[#allocation2 + $0x5d8] sm:$0xff]
    %v242 = vld [vmem:[#allocation2 + $0x5e0] sm:$0xff]
    %v243 = vld [vmem:[#allocation2 + $0x5e8] sm:$0xff]
    %v244 = vld [vmem:[#allocation2 + $0x5f0] sm:$0xff]
    %v245 = vld [vmem:[#allocation2 + $0x5f8] sm:$0xff]
    %v246 = vld [vmem:[#allocation2 + $0x600] sm:$0xff]
    %v247 = vld [vmem:[#allocation2 + $0x608] sm:$0xff]
    %v248 = vld [vmem:[#allocation2 + $0x610] sm:$0xff]
    %v249 = vld [vmem:[#allocation2 + $0x618] sm:$0xff]
    %v250 = vld [vmem:[#allocation2 + $0x620] sm:$0xff]
    %v251 = vld [vmem:[#allocation2 + $0x628] sm:$0xff]
    %v252 = vld [vmem:[#allocation2 + $0x630] sm:$0xff]
    %v253 = vld [vmem:[#allocation2 + $0x638] sm:$0xff]
    %v256 = vlaneseq
    %v257 = vshrl.u32 %v256, 7
    %v258 = vsub.s32 0, %v257
    %v259 = vrot.slane %v52, %v258
    %v260 = vlaneseq
    %v261 = vshrl.u32 %v260, 7
    %v262 = vsub.s32 4, %v261
    %v263 = vrot.slane %v52, %v262
    %v264 = vlaneseq
    %v265 = vshrl.u32 %v264, 7
    %v266 = vsub.s32 0, %v265
    %v267 = vrot.slane %v53, %v266
    %v268 = vlaneseq
    %v269 = vshrl.u32 %v268, 7
    %v270 = vsub.s32 4, %v269
    %v271 = vrot.slane %v53, %v270
    %v276 = vlaneseq
    %v277 = vshrl.u32 %v276, 7
    %v278 = vsub.s32 0, %v277
    %v279 = vrot.slane %v259, %v278
    %v280 = vlaneseq
    %v281 = vshrl.u32 %v280, 7
    %v282 = vsub.s32 0, %v281
    %v283 = vrot.slane %v263, %v282
    %v284 = vlaneseq
    %v285 = vshrl.u32 %v284, 7
    %v286 = vsub.s32 0, %v285
    %v287 = vrot.slane %v267, %v286
    %v288 = vlaneseq
    %v289 = vshrl.u32 %v288, 7
    %v290 = vsub.s32 0, %v289
    %v291 = vrot.slane %v271, %v290
    %v296 = vunpack.c.l.b16 %v48
    %v297 = vunpack.c.h.b16 %v48
    %v298 = vunpack.c.l.b16 %v49
    %v299 = vunpack.c.h.b16 %v49
    %v300 = vunpack.c.l.b16 %v50
    %v301 = vunpack.c.h.b16 %v50
    %v302 = vunpack.c.l.b16 %v51
    %v303 = vpack.c.b16 %v296, %v296
    %v304 = vpack.c.b16 %v297, %v297
    %v305 = vpack.c.b16 %v298, %v298
    %v306 = vpack.c.b16 %v299, %v299
    %v307 = vpack.c.b16 %v300, %v300
    %v308 = vpack.c.b16 %v301, %v301
    %v309 = vpack.c.b16 %v302, %v302
    %v516 = vunpack.c.l.b16 %v54
    %v517 = vunpack.c.h.b16 %v54
    %v518 = vunpack.c.l.b16 %v55
    %v519 = vunpack.c.h.b16 %v55
    %v520 = vunpack.c.l.b16 %v56
    %v521 = vunpack.c.h.b16 %v56
    %v522 = vunpack.c.l.b16 %v57
    %v523 = vunpack.c.h.b16 %v57
    %v524 = vunpack.c.l.b16 %v58
    %v525 = vunpack.c.h.b16 %v58
    %v526 = vunpack.c.l.b16 %v59
    %v527 = vunpack.c.h.b16 %v59
    %v528 = vunpack.c.l.b16 %v60
    %v529 = vunpack.c.h.b16 %v60
    %v530 = vunpack.c.l.b16 %v61
    %v531 = vunpack.c.h.b16 %v61
    %v532 = vunpack.c.l.b16 %v62
    %v533 = vunpack.c.h.b16 %v62
    %v534 = vunpack.c.l.b16 %v63
    %v535 = vunpack.c.h.b16 %v63
    %v536 = vunpack.c.l.b16 %v64
    %v537 = vunpack.c.h.b16 %v64
    %v538 = vunpack.c.l.b16 %v65
    %v539 = vunpack.c.h.b16 %v65
    %v540 = vunpack.c.l.b16 %v66
    %v541 = vunpack.c.h.b16 %v66
    %v542 = vunpack.c.l.b16 %v67
    %v543 = vunpack.c.h.b16 %v67
    %v544 = vunpack.c.l.b16 %v68
    %v545 = vunpack.c.h.b16 %v68
    %v546 = vunpack.c.l.b16 %v69
    %v547 = vunpack.c.h.b16 %v69
    %v548 = vunpack.c.l.b16 %v70
    %v549 = vunpack.c.h.b16 %v70
    %v550 = vunpack.c.l.b16 %v71
    %v551 = vunpack.c.h.b16 %v71
    %v552 = vunpack.c.l.b16 %v72
    %v553 = vunpack.c.h.b16 %v72
    %v554 = vunpack.c.l.b16 %v73
    %v555 = vunpack.c.h.b16 %v73
    %v556 = vunpack.c.l.b16 %v74
    %v557 = vunpack.c.h.b16 %v74
    %v558 = vunpack.c.l.b16 %v75
    %v559 = vunpack.c.h.b16 %v75
    %v560 = vunpack.c.l.b16 %v76
    %v561 = vunpack.c.h.b16 %v76
    %v562 = vunpack.c.l.b16 %v77
    %v563 = vunpack.c.h.b16 %v77
    %v564 = vunpack.c.l.b16 %v78
    %v565 = vunpack.c.h.b16 %v78
    %v566 = vunpack.c.l.b16 %v79
    %v567 = vunpack.c.h.b16 %v79
    %v568 = vunpack.c.l.b16 %v80
    %v569 = vunpack.c.h.b16 %v80
    %v570 = vunpack.c.l.b16 %v81
    %v571 = vunpack.c.h.b16 %v81
    %v572 = vunpack.c.l.b16 %v82
    %v573 = vunpack.c.h.b16 %v82
    %v574 = vunpack.c.l.b16 %v83
    %v575 = vunpack.c.h.b16 %v83
    %v576 = vunpack.c.l.b16 %v84
    %v577 = vunpack.c.h.b16 %v84
    %v578 = vunpack.c.l.b16 %v85
    %v579 = vunpack.c.h.b16 %v85
    %v580 = vunpack.c.l.b16 %v86
    %v581 = vunpack.c.h.b16 %v86
    %v582 = vunpack.c.l.b16 %v87
    %v583 = vunpack.c.h.b16 %v87
    %v584 = vunpack.c.l.b16 %v88
    %v585 = vunpack.c.h.b16 %v88
    %v586 = vunpack.c.l.b16 %v89
    %v587 = vunpack.c.h.b16 %v89
    %v588 = vunpack.c.l.b16 %v90
    %v589 = vunpack.c.h.b16 %v90
    %v590 = vunpack.c.l.b16 %v91
    %v591 = vunpack.c.h.b16 %v91
    %v592 = vunpack.c.l.b16 %v92
    %v593 = vunpack.c.h.b16 %v92
    %v594 = vunpack.c.l.b16 %v93
    %v595 = vunpack.c.h.b16 %v93
    %v596 = vunpack.c.l.b16 %v94
    %v597 = vunpack.c.h.b16 %v94
    %v598 = vunpack.c.l.b16 %v95
    %v599 = vunpack.c.h.b16 %v95
    %v600 = vunpack.c.l.b16 %v96
    %v601 = vunpack.c.h.b16 %v96
    %v602 = vunpack.c.l.b16 %v97
    %v603 = vunpack.c.h.b16 %v97
    %v604 = vunpack.c.l.b16 %v98
    %v605 = vunpack.c.h.b16 %v98
    %v606 = vunpack.c.l.b16 %v99
    %v607 = vunpack.c.h.b16 %v99
    %v608 = vunpack.c.l.b16 %v100
    %v609 = vunpack.c.h.b16 %v100
    %v610 = vunpack.c.l.b16 %v101
    %v611 = vunpack.c.h.b16 %v101
    %v612 = vunpack.c.l.b16 %v102
    %v613 = vunpack.c.h.b16 %v102
    %v614 = vunpack.c.l.b16 %v103
    %v615 = vunpack.c.h.b16 %v103
    %v616 = vunpack.c.l.b16 %v104
    %v617 = vunpack.c.h.b16 %v104
    %v618 = vunpack.c.l.b16 %v105
    %v619 = vunpack.c.h.b16 %v105
    %v620 = vunpack.c.l.b16 %v106
    %v621 = vunpack.c.h.b16 %v106
    %v622 = vunpack.c.l.b16 %v107
    %v623 = vunpack.c.h.b16 %v107
    %v624 = vunpack.c.l.b16 %v108
    %v625 = vunpack.c.h.b16 %v108
    %v626 = vunpack.c.l.b16 %v109
    %v627 = vunpack.c.h.b16 %v109
    %v628 = vunpack.c.l.b16 %v110
    %v629 = vunpack.c.h.b16 %v110
    %v630 = vunpack.c.l.b16 %v111
    %v631 = vunpack.c.h.b16 %v111
    %v632 = vunpack.c.l.b16 %v112
    %v633 = vunpack.c.h.b16 %v112
    %v634 = vunpack.c.l.b16 %v113
    %v635 = vunpack.c.h.b16 %v113
    %v636 = vunpack.c.l.b16 %v114
    %v637 = vunpack.c.h.b16 %v114
    %v638 = vunpack.c.l.b16 %v115
    %v639 = vunpack.c.h.b16 %v115
    %v640 = vunpack.c.l.b16 %v116
    %v641 = vunpack.c.h.b16 %v116
    %v642 = vunpack.c.l.b16 %v117
    %v643 = vunpack.c.h.b16 %v117
    %v644 = vunpack.c.l.b16 %v118
    %v645 = vunpack.c.h.b16 %v118
    %v646 = vunpack.c.l.b16 %v119
    %v647 = vunpack.c.h.b16 %v119
    %v648 = vunpack.c.l.b16 %v120
    %v649 = vunpack.c.h.b16 %v120
    %v650 = vunpack.c.l.b16 %v121
    %v651 = vunpack.c.h.b16 %v121
    %v652 = vunpack.c.l.b16 %v122
    %v653 = vunpack.c.h.b16 %v122
    %v654 = vunpack.c.l.b16 %v123
    %v655 = vunpack.c.h.b16 %v123
    %v656 = vunpack.c.l.b16 %v124
    %v657 = vunpack.c.h.b16 %v124
    %v658 = vunpack.c.l.b16 %v125
    %v659 = vunpack.c.h.b16 %v125
    %v660 = vunpack.c.l.b16 %v126
    %v661 = vunpack.c.h.b16 %v126
    %v662 = vunpack.c.l.b16 %v127
    %v663 = vunpack.c.h.b16 %v127
    %v664 = vunpack.c.l.b16 %v128
    %v665 = vunpack.c.h.b16 %v128
    %v666 = vunpack.c.l.b16 %v129
    %v667 = vunpack.c.h.b16 %v129
    %v668 = vunpack.c.l.b16 %v130
    %v669 = vunpack.c.h.b16 %v130
    %v670 = vunpack.c.l.b16 %v131
    %v671 = vunpack.c.h.b16 %v131
    %v672 = vunpack.c.l.b16 %v132
    %v673 = vunpack.c.h.b16 %v132
    %v674 = vunpack.c.l.b16 %v133
    %v675 = vunpack.c.h.b16 %v133
    %v676 = vunpack.c.l.b16 %v134
    %v677 = vunpack.c.h.b16 %v134
    %v678 = vunpack.c.l.b16 %v135
    %v679 = vunpack.c.h.b16 %v135
    %v680 = vunpack.c.l.b16 %v136
    %v681 = vunpack.c.h.b16 %v136
    %v682 = vunpack.c.l.b16 %v137
    %v683 = vunpack.c.h.b16 %v137
    %v684 = vunpack.c.l.b16 %v138
    %v685 = vunpack.c.h.b16 %v138
    %v686 = vunpack.c.l.b16 %v139
    %v687 = vunpack.c.h.b16 %v139
    %v688 = vunpack.c.l.b16 %v140
    %v689 = vunpack.c.h.b16 %v140
    %v690 = vunpack.c.l.b16 %v141
    %v691 = vunpack.c.h.b16 %v141
    %v692 = vunpack.c.l.b16 %v142
    %v693 = vunpack.c.h.b16 %v142
    %v694 = vunpack.c.l.b16 %v143
    %v695 = vunpack.c.h.b16 %v143
    %v696 = vunpack.c.l.b16 %v144
    %v697 = vunpack.c.h.b16 %v144
    %v698 = vunpack.c.l.b16 %v145
    %v699 = vunpack.c.h.b16 %v145
    %v700 = vunpack.c.l.b16 %v146
    %v701 = vunpack.c.h.b16 %v146
    %v702 = vunpack.c.l.b16 %v147
    %v703 = vunpack.c.h.b16 %v147
    %v704 = vunpack.c.l.b16 %v148
    %v705 = vunpack.c.h.b16 %v148
    %v706 = vunpack.c.l.b16 %v149
    %v707 = vunpack.c.h.b16 %v149
    %v708 = vunpack.c.l.b16 %v150
    %v709 = vunpack.c.h.b16 %v150
    %v710 = vunpack.c.l.b16 %v151
    %v711 = vunpack.c.h.b16 %v151
    %v712 = vunpack.c.l.b16 %v152
    %v713 = vunpack.c.h.b16 %v152
    %v714 = vunpack.c.l.b16 %v153
    %v715 = vunpack.c.h.b16 %v153
    %v716 = vunpack.c.l.b16 %v154
    %v717 = vunpack.c.h.b16 %v154
    %v718 = vunpack.c.l.b16 %v155
    %v719 = vunpack.c.h.b16 %v155
    %v720 = vunpack.c.l.b16 %v156
    %v721 = vunpack.c.h.b16 %v156
    %v722 = vunpack.c.l.b16 %v157
    %v723 = vunpack.c.h.b16 %v157
    %v724 = vunpack.c.l.b16 %v158
    %v725 = vunpack.c.h.b16 %v158
    %v726 = vunpack.c.l.b16 %v159
    %v727 = vunpack.c.h.b16 %v159
    %v728 = vunpack.c.l.b16 %v160
    %v729 = vunpack.c.h.b16 %v160
    %v730 = vunpack.c.l.b16 %v161
    %v731 = vunpack.c.h.b16 %v161
    %v732 = vunpack.c.l.b16 %v162
    %v733 = vunpack.c.h.b16 %v162
    %v734 = vunpack.c.l.b16 %v163
    %v735 = vunpack.c.h.b16 %v163
    %v736 = vunpack.c.l.b16 %v164
    %v737 = vunpack.c.h.b16 %v164
    %v738 = vunpack.c.l.b16 %v165
    %v739 = vunpack.c.h.b16 %v165
    %v740 = vunpack.c.l.b16 %v166
    %v741 = vunpack.c.h.b16 %v166
    %v742 = vunpack.c.l.b16 %v167
    %v743 = vunpack.c.h.b16 %v167
    %v744 = vunpack.c.l.b16 %v168
    %v745 = vunpack.c.h.b16 %v168
    %v746 = vunpack.c.l.b16 %v169
    %v747 = vunpack.c.h.b16 %v169
    %v748 = vunpack.c.l.b16 %v170
    %v749 = vunpack.c.h.b16 %v170
    %v750 = vunpack.c.l.b16 %v171
    %v751 = vunpack.c.h.b16 %v171
    %v752 = vunpack.c.l.b16 %v172
    %v753 = vunpack.c.h.b16 %v172
    %v754 = vunpack.c.l.b16 %v173
    %v755 = vunpack.c.h.b16 %v173
    %v756 = vunpack.c.l.b16 %v174
    %v757 = vunpack.c.h.b16 %v174
    %v758 = vunpack.c.l.b16 %v175
    %v759 = vunpack.c.h.b16 %v175
    %v760 = vunpack.c.l.b16 %v176
    %v761 = vunpack.c.h.b16 %v176
    %v762 = vunpack.c.l.b16 %v177
    %v763 = vunpack.c.h.b16 %v177
    %v764 = vunpack.c.l.b16 %v178
    %v765 = vunpack.c.h.b16 %v178
    %v766 = vunpack.c.l.b16 %v179
    %v767 = vunpack.c.h.b16 %v179
    %v768 = vunpack.c.l.b16 %v180
    %v769 = vunpack.c.h.b16 %v180
    %v770 = vunpack.c.l.b16 %v181
    %v771 = vunpack.c.h.b16 %v181
    %v772 = vunpack.c.l.b16 %v182
    %v773 = vunpack.c.h.b16 %v182
    %v774 = vunpack.c.l.b16 %v183
    %v775 = vunpack.c.h.b16 %v183
    %v776 = vunpack.c.l.b16 %v184
    %v777 = vunpack.c.h.b16 %v184
    %v778 = vunpack.c.l.b16 %v185
    %v779 = vunpack.c.h.b16 %v185
    %v780 = vunpack.c.l.b16 %v186
    %v781 = vunpack.c.h.b16 %v186
    %v782 = vunpack.c.l.b16 %v187
    %v783 = vunpack.c.h.b16 %v187
    %v784 = vunpack.c.l.b16 %v188
    %v785 = vunpack.c.h.b16 %v188
    %v786 = vunpack.c.l.b16 %v189
    %v787 = vunpack.c.h.b16 %v189
    %v788 = vunpack.c.l.b16 %v190
    %v789 = vunpack.c.h.b16 %v190
    %v790 = vunpack.c.l.b16 %v191
    %v791 = vunpack.c.h.b16 %v191
    %v792 = vunpack.c.l.b16 %v192
    %v793 = vunpack.c.h.b16 %v192
    %v794 = vunpack.c.l.b16 %v193
    %v795 = vunpack.c.h.b16 %v193
    %v796 = vunpack.c.l.b16 %v194
    %v797 = vunpack.c.h.b16 %v194
    %v798 = vunpack.c.l.b16 %v195
    %v799 = vunpack.c.h.b16 %v195
    %v800 = vunpack.c.l.b16 %v196
    %v801 = vunpack.c.h.b16 %v196
    %v802 = vunpack.c.l.b16 %v197
    %v803 = vunpack.c.h.b16 %v197
    %v804 = vunpack.c.l.b16 %v198
    %v805 = vunpack.c.h.b16 %v198
    %v806 = vunpack.c.l.b16 %v199
    %v807 = vunpack.c.h.b16 %v199
    %v808 = vunpack.c.l.b16 %v200
    %v809 = vunpack.c.h.b16 %v200
    %v810 = vunpack.c.l.b16 %v201
    %v811 = vunpack.c.h.b16 %v201
    %v812 = vunpack.c.l.b16 %v202
    %v813 = vunpack.c.h.b16 %v202
    %v814 = vunpack.c.l.b16 %v203
    %v815 = vunpack.c.h.b16 %v203
    %v816 = vunpack.c.l.b16 %v204
    %v817 = vunpack.c.h.b16 %v204
    %v818 = vunpack.c.l.b16 %v205
    %v819 = vunpack.c.h.b16 %v205
    %v820 = vunpack.c.l.b16 %v206
    %v821 = vunpack.c.h.b16 %v206
    %v822 = vunpack.c.l.b16 %v207
    %v823 = vunpack.c.h.b16 %v207
    %v824 = vunpack.c.l.b16 %v208
    %v825 = vunpack.c.h.b16 %v208
    %v826 = vunpack.c.l.b16 %v209
    %v827 = vunpack.c.h.b16 %v209
    %v828 = vunpack.c.l.b16 %v210
    %v829 = vunpack.c.h.b16 %v210
    %v830 = vunpack.c.l.b16 %v211
    %v831 = vunpack.c.h.b16 %v211
    %v832 = vunpack.c.l.b16 %v212
    %v833 = vunpack.c.h.b16 %v212
    %v834 = vunpack.c.l.b16 %v213
    %v835 = vunpack.c.h.b16 %v213
    %v836 = vunpack.c.l.b16 %v214
    %v837 = vunpack.c.h.b16 %v214
    %v838 = vunpack.c.l.b16 %v215
    %v839 = vunpack.c.h.b16 %v215
    %v840 = vunpack.c.l.b16 %v216
    %v841 = vunpack.c.h.b16 %v216
    %v842 = vunpack.c.l.b16 %v217
    %v843 = vunpack.c.h.b16 %v217
    %v844 = vunpack.c.l.b16 %v218
    %v845 = vunpack.c.h.b16 %v218
    %v846 = vunpack.c.l.b16 %v219
    %v847 = vunpack.c.h.b16 %v219
    %v848 = vunpack.c.l.b16 %v220
    %v849 = vunpack.c.h.b16 %v220
    %v850 = vunpack.c.l.b16 %v221
    %v851 = vunpack.c.h.b16 %v221
    %v852 = vunpack.c.l.b16 %v222
    %v853 = vunpack.c.h.b16 %v222
    %v854 = vunpack.c.l.b16 %v223
    %v855 = vunpack.c.h.b16 %v223
    %v856 = vunpack.c.l.b16 %v224
    %v857 = vunpack.c.h.b16 %v224
    %v858 = vunpack.c.l.b16 %v225
    %v859 = vunpack.c.h.b16 %v225
    %v860 = vunpack.c.l.b16 %v226
    %v861 = vunpack.c.h.b16 %v226
    %v862 = vunpack.c.l.b16 %v227
    %v863 = vunpack.c.h.b16 %v227
    %v864 = vunpack.c.l.b16 %v228
    %v865 = vunpack.c.h.b16 %v228
    %v866 = vunpack.c.l.b16 %v229
    %v867 = vunpack.c.h.b16 %v229
    %v868 = vunpack.c.l.b16 %v230
    %v869 = vunpack.c.h.b16 %v230
    %v870 = vunpack.c.l.b16 %v231
    %v871 = vunpack.c.h.b16 %v231
    %v872 = vunpack.c.l.b16 %v232
    %v873 = vunpack.c.h.b16 %v232
    %v874 = vunpack.c.l.b16 %v233
    %v875 = vunpack.c.h.b16 %v233
    %v876 = vunpack.c.l.b16 %v234
    %v877 = vunpack.c.h.b16 %v234
    %v878 = vunpack.c.l.b16 %v235
    %v879 = vunpack.c.h.b16 %v235
    %v880 = vunpack.c.l.b16 %v236
    %v881 = vunpack.c.h.b16 %v236
    %v882 = vunpack.c.l.b16 %v237
    %v883 = vunpack.c.h.b16 %v237
    %v884 = vunpack.c.l.b16 %v238
    %v885 = vunpack.c.h.b16 %v238
    %v886 = vunpack.c.l.b16 %v239
    %v887 = vunpack.c.h.b16 %v239
    %v888 = vunpack.c.l.b16 %v240
    %v889 = vunpack.c.h.b16 %v240
    %v890 = vunpack.c.l.b16 %v241
    %v891 = vunpack.c.h.b16 %v241
    %v892 = vunpack.c.l.b16 %v242
    %v893 = vunpack.c.h.b16 %v242
    %v894 = vunpack.c.l.b16 %v243
    %v895 = vunpack.c.h.b16 %v243
    %v896 = vunpack.c.l.b16 %v244
    %v897 = vunpack.c.h.b16 %v244
    %v898 = vunpack.c.l.b16 %v245
    %v899 = vunpack.c.h.b16 %v245
    %v900 = vunpack.c.l.b16 %v246
    %v901 = vunpack.c.h.b16 %v246
    %v902 = vunpack.c.l.b16 %v247
    %v903 = vunpack.c.h.b16 %v247
    %v904 = vunpack.c.l.b16 %v248
    %v905 = vunpack.c.h.b16 %v248
    %v906 = vunpack.c.l.b16 %v249
    %v907 = vunpack.c.h.b16 %v249
    %v908 = vunpack.c.l.b16 %v250
    %v909 = vunpack.c.h.b16 %v250
    %v910 = vunpack.c.l.b16 %v251
    %v911 = vunpack.c.h.b16 %v251
    %v912 = vunpack.c.l.b16 %v252
    %v913 = vunpack.c.h.b16 %v252
    %v914 = vunpack.c.l.b16 %v253
    %v915 = vunpack.c.h.b16 %v253
    %v916 = vpack.c.b16 %v520, %v516
    %v917 = vpack.c.b16 %v521, %v517
    %v918 = vpack.c.b16 %v522, %v518
    %v919 = vpack.c.b16 %v523, %v519
    %v920 = vpack.c.b16 %v528, %v524
    %v921 = vpack.c.b16 %v529, %v525
    %v922 = vpack.c.b16 %v530, %v526
    %v923 = vpack.c.b16 %v531, %v527
    %v924 = vpack.c.b16 %v536, %v532
    %v925 = vpack.c.b16 %v537, %v533
    %v926 = vpack.c.b16 %v538, %v534
    %v927 = vpack.c.b16 %v539, %v535
    %v928 = vpack.c.b16 %v544, %v540
    %v929 = vpack.c.b16 %v545, %v541
    %v930 = vpack.c.b16 %v546, %v542
    %v931 = vpack.c.b16 %v547, %v543
    %v932 = vpack.c.b16 %v552, %v548
    %v933 = vpack.c.b16 %v553, %v549
    %v934 = vpack.c.b16 %v554, %v550
    %v935 = vpack.c.b16 %v555, %v551
    %v936 = vpack.c.b16 %v560, %v556
    %v937 = vpack.c.b16 %v561, %v557
    %v938 = vpack.c.b16 %v562, %v558
    %v939 = vpack.c.b16 %v563, %v559
    %v940 = vpack.c.b16 %v568, %v564
    %v941 = vpack.c.b16 %v569, %v565
    %v942 = vpack.c.b16 %v570, %v566
    %v943 = vpack.c.b16 %v571, %v567
    %v944 = vpack.c.b16 %v576, %v572
    %v945 = vpack.c.b16 %v577, %v573
    %v946 = vpack.c.b16 %v578, %v574
    %v947 = vpack.c.b16 %v579, %v575
    %v948 = vpack.c.b16 %v584, %v580
    %v949 = vpack.c.b16 %v585, %v581
    %v950 = vpack.c.b16 %v586, %v582
    %v951 = vpack.c.b16 %v587, %v583
    %v952 = vpack.c.b16 %v592, %v588
    %v953 = vpack.c.b16 %v593, %v589
    %v954 = vpack.c.b16 %v594, %v590
    %v955 = vpack.c.b16 %v595, %v591
    %v956 = vpack.c.b16 %v600, %v596
    %v957 = vpack.c.b16 %v601, %v597
    %v958 = vpack.c.b16 %v602, %v598
    %v959 = vpack.c.b16 %v603, %v599
    %v960 = vpack.c.b16 %v608, %v604
    %v961 = vpack.c.b16 %v609, %v605
    %v962 = vpack.c.b16 %v610, %v606
    %v963 = vpack.c.b16 %v611, %v607
    %v964 = vpack.c.b16 %v616, %v612
    %v965 = vpack.c.b16 %v617, %v613
    %v966 = vpack.c.b16 %v618, %v614
    %v967 = vpack.c.b16 %v619, %v615
    %v968 = vpack.c.b16 %v624, %v620
    %v969 = vpack.c.b16 %v625, %v621
    %v970 = vpack.c.b16 %v626, %v622
    %v971 = vpack.c.b16 %v627, %v623
    %v972 = vpack.c.b16 %v632, %v628
    %v973 = vpack.c.b16 %v633, %v629
    %v974 = vpack.c.b16 %v634, %v630
    %v975 = vpack.c.b16 %v635, %v631
    %v976 = vpack.c.b16 %v640, %v636
    %v977 = vpack.c.b16 %v641, %v637
    %v978 = vpack.c.b16 %v642, %v638
    %v979 = vpack.c.b16 %v643, %v639
    %v980 = vpack.c.b16 %v648, %v644
    %v981 = vpack.c.b16 %v649, %v645
    %v982 = vpack.c.b16 %v650, %v646
    %v983 = vpack.c.b16 %v651, %v647
    %v984 = vpack.c.b16 %v656, %v652
    %v985 = vpack.c.b16 %v657, %v653
    %v986 = vpack.c.b16 %v658, %v654
    %v987 = vpack.c.b16 %v659, %v655
    %v988 = vpack.c.b16 %v664, %v660
    %v989 = vpack.c.b16 %v665, %v661
    %v990 = vpack.c.b16 %v666, %v662
    %v991 = vpack.c.b16 %v667, %v663
    %v992 = vpack.c.b16 %v672, %v668
    %v993 = vpack.c.b16 %v673, %v669
    %v994 = vpack.c.b16 %v674, %v670
    %v995 = vpack.c.b16 %v675, %v671
    %v996 = vpack.c.b16 %v680, %v676
    %v997 = vpack.c.b16 %v681, %v677
    %v998 = vpack.c.b16 %v682, %v678
    %v999 = vpack.c.b16 %v683, %v679
    %v1000 = vpack.c.b16 %v688, %v684
    %v1001 = vpack.c.b16 %v689, %v685
    %v1002 = vpack.c.b16 %v690, %v686
    %v1003 = vpack.c.b16 %v691, %v687
    %v1004 = vpack.c.b16 %v696, %v692
    %v1005 = vpack.c.b16 %v697, %v693
    %v1006 = vpack.c.b16 %v698, %v694
    %v1007 = vpack.c.b16 %v699, %v695
    %v1008 = vpack.c.b16 %v704, %v700
    %v1009 = vpack.c.b16 %v705, %v701
    %v1010 = vpack.c.b16 %v706, %v702
    %v1011 = vpack.c.b16 %v707, %v703
    %v1012 = vpack.c.b16 %v712, %v708
    %v1013 = vpack.c.b16 %v713, %v709
    %v1014 = vpack.c.b16 %v714, %v710
    %v1015 = vpack.c.b16 %v715, %v711
    %v1016 = vpack.c.b16 %v720, %v716
    %v1017 = vpack.c.b16 %v721, %v717
    %v1018 = vpack.c.b16 %v722, %v718
    %v1019 = vpack.c.b16 %v723, %v719
    %v1020 = vpack.c.b16 %v728, %v724
    %v1021 = vpack.c.b16 %v729, %v725
    %v1022 = vpack.c.b16 %v730, %v726
    %v1023 = vpack.c.b16 %v731, %v727
    %v1024 = vpack.c.b16 %v736, %v732
    %v1025 = vpack.c.b16 %v737, %v733
    %v1026 = vpack.c.b16 %v738, %v734
    %v1027 = vpack.c.b16 %v739, %v735
    %v1028 = vpack.c.b16 %v744, %v740
    %v1029 = vpack.c.b16 %v745, %v741
    %v1030 = vpack.c.b16 %v746, %v742
    %v1031 = vpack.c.b16 %v747, %v743
    %v1032 = vpack.c.b16 %v752, %v748
    %v1033 = vpack.c.b16 %v753, %v749
    %v1034 = vpack.c.b16 %v754, %v750
    %v1035 = vpack.c.b16 %v755, %v751
    %v1036 = vpack.c.b16 %v760, %v756
    %v1037 = vpack.c.b16 %v761, %v757
    %v1038 = vpack.c.b16 %v762, %v758
    %v1039 = vpack.c.b16 %v763, %v759
    %v1040 = vpack.c.b16 %v768, %v764
    %v1041 = vpack.c.b16 %v769, %v765
    %v1042 = vpack.c.b16 %v770, %v766
    %v1043 = vpack.c.b16 %v771, %v767
    %v1044 = vpack.c.b16 %v776, %v772
    %v1045 = vpack.c.b16 %v777, %v773
    %v1046 = vpack.c.b16 %v778, %v774
    %v1047 = vpack.c.b16 %v779, %v775
    %v1048 = vpack.c.b16 %v784, %v780
    %v1049 = vpack.c.b16 %v785, %v781
    %v1050 = vpack.c.b16 %v786, %v782
    %v1051 = vpack.c.b16 %v787, %v783
    %v1052 = vpack.c.b16 %v792, %v788
    %v1053 = vpack.c.b16 %v793, %v789
    %v1054 = vpack.c.b16 %v794, %v790
    %v1055 = vpack.c.b16 %v795, %v791
    %v1056 = vpack.c.b16 %v800, %v796
    %v1057 = vpack.c.b16 %v801, %v797
    %v1058 = vpack.c.b16 %v802, %v798
    %v1059 = vpack.c.b16 %v803, %v799
    %v1060 = vpack.c.b16 %v808, %v804
    %v1061 = vpack.c.b16 %v809, %v805
    %v1062 = vpack.c.b16 %v810, %v806
    %v1063 = vpack.c.b16 %v811, %v807
    %v1064 = vpack.c.b16 %v816, %v812
    %v1065 = vpack.c.b16 %v817, %v813
    %v1066 = vpack.c.b16 %v818, %v814
    %v1067 = vpack.c.b16 %v819, %v815
    %v1068 = vpack.c.b16 %v824, %v820
    %v1069 = vpack.c.b16 %v825, %v821
    %v1070 = vpack.c.b16 %v826, %v822
    %v1071 = vpack.c.b16 %v827, %v823
    %v1072 = vpack.c.b16 %v832, %v828
    %v1073 = vpack.c.b16 %v833, %v829
    %v1074 = vpack.c.b16 %v834, %v830
    %v1075 = vpack.c.b16 %v835, %v831
    %v1076 = vpack.c.b16 %v840, %v836
    %v1077 = vpack.c.b16 %v841, %v837
    %v1078 = vpack.c.b16 %v842, %v838
    %v1079 = vpack.c.b16 %v843, %v839
    %v1080 = vpack.c.b16 %v848, %v844
    %v1081 = vpack.c.b16 %v849, %v845
    %v1082 = vpack.c.b16 %v850, %v846
    %v1083 = vpack.c.b16 %v851, %v847
    %v1084 = vpack.c.b16 %v856, %v852
    %v1085 = vpack.c.b16 %v857, %v853
    %v1086 = vpack.c.b16 %v858, %v854
    %v1087 = vpack.c.b16 %v859, %v855
    %v1088 = vpack.c.b16 %v864, %v860
    %v1089 = vpack.c.b16 %v865, %v861
    %v1090 = vpack.c.b16 %v866, %v862
    %v1091 = vpack.c.b16 %v867, %v863
    %v1092 = vpack.c.b16 %v872, %v868
    %v1093 = vpack.c.b16 %v873, %v869
    %v1094 = vpack.c.b16 %v874, %v870
    %v1095 = vpack.c.b16 %v875, %v871
    %v1096 = vpack.c.b16 %v880, %v876
    %v1097 = vpack.c.b16 %v881, %v877
    %v1098 = vpack.c.b16 %v882, %v878
    %v1099 = vpack.c.b16 %v883, %v879
    %v1100 = vpack.c.b16 %v888, %v884
    %v1101 = vpack.c.b16 %v889, %v885
    %v1102 = vpack.c.b16 %v890, %v886
    %v1103 = vpack.c.b16 %v891, %v887
    %v1104 = vpack.c.b16 %v896, %v892
    %v1105 = vpack.c.b16 %v897, %v893
    %v1106 = vpack.c.b16 %v898, %v894
    %v1107 = vpack.c.b16 %v899, %v895
    %v1108 = vpack.c.b16 %v904, %v900
    %v1109 = vpack.c.b16 %v905, %v901
    %v1110 = vpack.c.b16 %v906, %v902
    %v1111 = vpack.c.b16 %v907, %v903
    %v1112 = vpack.c.b16 %v912, %v908
    %v1113 = vpack.c.b16 %v913, %v909
    %v1114 = vpack.c.b16 %v914, %v910
    %v1115 = vpack.c.b16 %v915, %v911
    %vm1316 = vcmask 261120
    %v1318 = vsel %vm1316, %v309, 0
    %1320 = vmatprep.subr.bf16.mxu0 %v945
    %1321 = vmatpush1.bf16.msra.mxu0 %v944
    %1322 = vmatprep.subr.bf16.mxu0 %v941
    %1323 = vmatpush1.bf16.msra.mxu0 %v940
    %1324 = vmatprep.subr.bf16.mxu0 %v937
    %1325 = vmatpush1.bf16.msra.mxu0 %v936
    %1326 = vmatprep.subr.bf16.mxu0 %v933
    %1327 = vmatpush1.bf16.msra.mxu0 %v932
    %1328 = vmatprep.subr.bf16.mxu0 %v929
    %1329 = vmatpush1.bf16.msra.mxu0 %v928
    %1330 = vmatprep.subr.bf16.mxu0 %v925
    %1331 = vmatpush1.bf16.msra.mxu0 %v924
    %1332 = vmatprep.subr.bf16.mxu0 %v921
    %1333 = vmatpush1.bf16.msra.mxu0 %v920
    %1334 = vmatprep.subr.bf16.mxu0 %v917
    %1335 = vmatpush1.bf16.msra.mxu0 %v916
    %1336 = vmatprep.subr.bf16.mxu0 %v977
    %1337 = vmatpush2.bf16.msra.mxu0 %v976
    %1338 = vmatprep.subr.bf16.mxu0 %v973
    %1339 = vmatpush2.bf16.msra.mxu0 %v972
    %1340 = vmatprep.subr.bf16.mxu0 %v969
    %1341 = vmatpush2.bf16.msra.mxu0 %v968
    %1342 = vmatprep.subr.bf16.mxu0 %v965
    %1343 = vmatpush2.bf16.msra.mxu0 %v964
    %1344 = vmatprep.subr.bf16.mxu0 %v961
    %1345 = vmatpush2.bf16.msra.mxu0 %v960
    %1346 = vmatprep.subr.bf16.mxu0 %v957
    %1347 = vmatpush2.bf16.msra.mxu0 %v956
    %1348 = vmatprep.subr.bf16.mxu0 %v953
    %1349 = vmatpush2.bf16.msra.mxu0 %v952
    %1350 = vmatprep.subr.bf16.mxu0 %v949
    %1351 = vmatpush2.bf16.msra.mxu0 %v948
    %1352 = vmatprep.mubr.bf16.mxu0 %v304
    %1353 = vmatmul.mubr.bf16.gmra.mxu0 %v303
    %v1354 = vpop.f32.mrf.mxu0
    %v1355 = vadd.f32 %v279, %v1354
    %v1356 = vpop.f32.mrf.mxu0
    %v1357 = vadd.f32 %v283, %v1356
    %v1358 = vpop.f32.mrf.mxu0
    %v1359 = vpop.f32.mrf.mxu0
    %1360 = vdwg.mxu0
    %1361 = vmatprep.subr.bf16.mxu0 %v1009
    %1362 = vmatpush1.bf16.msra.mxu0 %v1008
    %1363 = vmatprep.subr.bf16.mxu0 %v1005
    %1364 = vmatpush1.bf16.msra.mxu0 %v1004
    %1365 = vmatprep.subr.bf16.mxu0 %v1001
    %1366 = vmatpush1.bf16.msra.mxu0 %v1000
    %1367 = vmatprep.subr.bf16.mxu0 %v997
    %1368 = vmatpush1.bf16.msra.mxu0 %v996
    %1369 = vmatprep.subr.bf16.mxu0 %v993
    %1370 = vmatpush1.bf16.msra.mxu0 %v992
    %1371 = vmatprep.subr.bf16.mxu0 %v989
    %1372 = vmatpush1.bf16.msra.mxu0 %v988
    %1373 = vmatprep.subr.bf16.mxu0 %v985
    %1374 = vmatpush1.bf16.msra.mxu0 %v984
    %1375 = vmatprep.subr.bf16.mxu0 %v981
    %1376 = vmatpush1.bf16.msra.mxu0 %v980
    %1377 = vmatprep.subr.bf16.mxu0 %v1041
    %1378 = vmatpush2.bf16.msra.mxu0 %v1040
    %1379 = vmatprep.subr.bf16.mxu0 %v1037
    %1380 = vmatpush2.bf16.msra.mxu0 %v1036
    %1381 = vmatprep.subr.bf16.mxu0 %v1033
    %1382 = vmatpush2.bf16.msra.mxu0 %v1032
    %1383 = vmatprep.subr.bf16.mxu0 %v1029
    %1384 = vmatpush2.bf16.msra.mxu0 %v1028
    %1385 = vmatprep.subr.bf16.mxu0 %v1025
    %1386 = vmatpush2.bf16.msra.mxu0 %v1024
    %1387 = vmatprep.subr.bf16.mxu0 %v1021
    %1388 = vmatpush2.bf16.msra.mxu0 %v1020
    %1389 = vmatprep.subr.bf16.mxu0 %v1017
    %1390 = vmatpush2.bf16.msra.mxu0 %v1016
    %1391 = vmatprep.subr.bf16.mxu0 %v1013
    %1392 = vmatpush2.bf16.msra.mxu0 %v1012
    %1393 = vmatprep.mubr.bf16.mxu0 %v306
    %1394 = vmatmul.mubr.bf16.gmra.mxu0 %v305
    %v1395 = vpop.f32.mrf.mxu0
    %v1396 = vadd.f32 %v1355, %v1395
    %v1397 = vpop.f32.mrf.mxu0
    %v1398 = vadd.f32 %v1357, %v1397
    %v1399 = vpop.f32.mrf.mxu0
    %v1400 = vpop.f32.mrf.mxu0
    %1401 = vdwg.mxu0
    %1402 = vmatprep.subr.bf16.mxu0 %v1073
    %1403 = vmatpush1.bf16.msra.mxu0 %v1072
    %1404 = vmatprep.subr.bf16.mxu0 %v1069
    %1405 = vmatpush1.bf16.msra.mxu0 %v1068
    %1406 = vmatprep.subr.bf16.mxu0 %v1065
    %1407 = vmatpush1.bf16.msra.mxu0 %v1064
    %1408 = vmatprep.subr.bf16.mxu0 %v1061
    %1409 = vmatpush1.bf16.msra.mxu0 %v1060
    %1410 = vmatprep.subr.bf16.mxu0 %v1057
    %1411 = vmatpush1.bf16.msra.mxu0 %v1056
    %1412 = vmatprep.subr.bf16.mxu0 %v1053
    %1413 = vmatpush1.bf16.msra.mxu0 %v1052
    %1414 = vmatprep.subr.bf16.mxu0 %v1049
    %1415 = vmatpush1.bf16.msra.mxu0 %v1048
    %1416 = vmatprep.subr.bf16.mxu0 %v1045
    %1417 = vmatpush1.bf16.msra.mxu0 %v1044
    %1418 = vmatprep.subr.bf16.mxu0 %v1105
    %1419 = vmatpush2.bf16.msra.mxu0 %v1104
    %1420 = vmatprep.subr.bf16.mxu0 %v1101
    %1421 = vmatpush2.bf16.msra.mxu0 %v1100
    %1422 = vmatprep.subr.bf16.mxu0 %v1097
    %1423 = vmatpush2.bf16.msra.mxu0 %v1096
    %1424 = vmatprep.subr.bf16.mxu0 %v1093
    %1425 = vmatpush2.bf16.msra.mxu0 %v1092
    %1426 = vmatprep.subr.bf16.mxu0 %v1089
    %1427 = vmatpush2.bf16.msra.mxu0 %v1088
    %1428 = vmatprep.subr.bf16.mxu0 %v1085
    %1429 = vmatpush2.bf16.msra.mxu0 %v1084
    %1430 = vmatprep.subr.bf16.mxu0 %v1081
    %1431 = vmatpush2.bf16.msra.mxu0 %v1080
    %1432 = vmatprep.subr.bf16.mxu0 %v1077
    %1433 = vmatpush2.bf16.msra.mxu0 %v1076
    %1434 = vmatprep.mubr.bf16.mxu0 %v308
    %1435 = vmatmul.mubr.bf16.gmra.mxu0 %v307
    %v1436 = vpop.f32.mrf.mxu0
    %v1437 = vadd.f32 %v1396, %v1436
    %v1438 = vpop.f32.mrf.mxu0
    %v1439 = vadd.f32 %v1398, %v1438
    %v1440 = vpop.f32.mrf.mxu0
    %v1441 = vpop.f32.mrf.mxu0
    %1442 = vdwg.mxu0
    %1443 = vmatprep.subr.bf16.mxu0 0
    %1444 = vmatpush1.bf16.msra.mxu0 0
    %1445 = vmatprep.subr.bf16.mxu0 0
    %1446 = vmatpush1.bf16.msra.mxu0 0
    %1447 = vmatprep.subr.bf16.mxu0 0
    %1448 = vmatpush1.bf16.msra.mxu0 0
    %1449 = vmatprep.subr.bf16.mxu0 0
    %1450 = vmatpush1.bf16.msra.mxu0 0
    %1451 = vmatprep.subr.bf16.mxu0 0
    %1452 = vmatpush1.bf16.msra.mxu0 0
    %1453 = vmatprep.subr.bf16.mxu0 0
    %1454 = vmatpush1.bf16.msra.mxu0 0
    %1455 = vmatprep.subr.bf16.mxu0 %v1113
    %1456 = vmatpush1.bf16.msra.mxu0 %v1112
    %1457 = vmatprep.subr.bf16.mxu0 %v1109
    %1458 = vmatpush1.bf16.msra.mxu0 %v1108
    %1459 = vmatprep.subr.bf16.mxu0 0
    %1460 = vmatpush2.bf16.msra.mxu0 0
    %1461 = vmatprep.subr.bf16.mxu0 0
    %1462 = vmatpush2.bf16.msra.mxu0 0
    %1463 = vmatprep.subr.bf16.mxu0 0
    %1464 = vmatpush2.bf16.msra.mxu0 0
    %1465 = vmatprep.subr.bf16.mxu0 0
    %1466 = vmatpush2.bf16.msra.mxu0 0
    %1467 = vmatprep.subr.bf16.mxu0 0
    %1468 = vmatpush2.bf16.msra.mxu0 0
    %1469 = vmatprep.subr.bf16.mxu0 0
    %1470 = vmatpush2.bf16.msra.mxu0 0
    %1471 = vmatprep.subr.bf16.mxu0 0
    %1472 = vmatpush2.bf16.msra.mxu0 0
    %1473 = vmatprep.subr.bf16.mxu0 0
    %1474 = vmatpush2.bf16.msra.mxu0 0
    %1475 = vmatprep.mubr.bf16.mxu0 0
    %1476 = vmatmul.mubr.bf16.gmra.mxu0 %v1318
    %v1477 = vpop.f32.mrf.mxu0
    %v1478 = vadd.f32 %v1437, %v1477
    %v1479 = vpop.f32.mrf.mxu0
    %v1480 = vadd.f32 %v1439, %v1479
    %v1481 = vpop.f32.mrf.mxu0
    %v1482 = vpop.f32.mrf.mxu0
    %1483 = vdwg.mxu0
    %1484 = vmatprep.subr.bf16.mxu0 %v947
    %1485 = vmatpush1.bf16.msra.mxu0 %v946
    %1486 = vmatprep.subr.bf16.mxu0 %v943
    %1487 = vmatpush1.bf16.msra.mxu0 %v942
    %1488 = vmatprep.subr.bf16.mxu0 %v939
    %1489 = vmatpush1.bf16.msra.mxu0 %v938
    %1490 = vmatprep.subr.bf16.mxu0 %v935
    %1491 = vmatpush1.bf16.msra.mxu0 %v934
    %1492 = vmatprep.subr.bf16.mxu0 %v931
    %1493 = vmatpush1.bf16.msra.mxu0 %v930
    %1494 = vmatprep.subr.bf16.mxu0 %v927
    %1495 = vmatpush1.bf16.msra.mxu0 %v926
    %1496 = vmatprep.subr.bf16.mxu0 %v923
    %1497 = vmatpush1.bf16.msra.mxu0 %v922
    %1498 = vmatprep.subr.bf16.mxu0 %v919
    %1499 = vmatpush1.bf16.msra.mxu0 %v918
    %1500 = vmatprep.subr.bf16.mxu0 %v979
    %1501 = vmatpush2.bf16.msra.mxu0 %v978
    %1502 = vmatprep.subr.bf16.mxu0 %v975
    %1503 = vmatpush2.bf16.msra.mxu0 %v974
    %1504 = vmatprep.subr.bf16.mxu0 %v971
    %1505 = vmatpush2.bf16.msra.mxu0 %v970
    %1506 = vmatprep.subr.bf16.mxu0 %v967
    %1507 = vmatpush2.bf16.msra.mxu0 %v966
    %1508 = vmatprep.subr.bf16.mxu0 %v963
    %1509 = vmatpush2.bf16.msra.mxu0 %v962
    %1510 = vmatprep.subr.bf16.mxu0 %v959
    %1511 = vmatpush2.bf16.msra.mxu0 %v958
    %1512 = vmatprep.subr.bf16.mxu0 %v955
    %1513 = vmatpush2.bf16.msra.mxu0 %v954
    %1514 = vmatprep.subr.bf16.mxu0 %v951
    %1515 = vmatpush2.bf16.msra.mxu0 %v950
    %1516 = vmatprep.mubr.bf16.mxu0 %v304
    %1517 = vmatmul.mubr.bf16.gmra.mxu0 %v303
    %v1518 = vpop.f32.mrf.mxu0
    %v1519 = vadd.f32 %v287, %v1518
    %v1520 = vpop.f32.mrf.mxu0
    %v1521 = vadd.f32 %v291, %v1520
    %v1522 = vpop.f32.mrf.mxu0
    %v1523 = vpop.f32.mrf.mxu0
    %1524 = vdwg.mxu0
    %1525 = vmatprep.subr.bf16.mxu0 %v1011
    %1526 = vmatpush1.bf16.msra.mxu0 %v1010
    %1527 = vmatprep.subr.bf16.mxu0 %v1007
    %1528 = vmatpush1.bf16.msra.mxu0 %v1006
    %1529 = vmatprep.subr.bf16.mxu0 %v1003
    %1530 = vmatpush1.bf16.msra.mxu0 %v1002
    %1531 = vmatprep.subr.bf16.mxu0 %v999
    %1532 = vmatpush1.bf16.msra.mxu0 %v998
    %1533 = vmatprep.subr.bf16.mxu0 %v995
    %1534 = vmatpush1.bf16.msra.mxu0 %v994
    %1535 = vmatprep.subr.bf16.mxu0 %v991
    %1536 = vmatpush1.bf16.msra.mxu0 %v990
    %1537 = vmatprep.subr.bf16.mxu0 %v987
    %1538 = vmatpush1.bf16.msra.mxu0 %v986
    %1539 = vmatprep.subr.bf16.mxu0 %v983
    %1540 = vmatpush1.bf16.msra.mxu0 %v982
    %1541 = vmatprep.subr.bf16.mxu0 %v1043
    %1542 = vmatpush2.bf16.msra.mxu0 %v1042
    %1543 = vmatprep.subr.bf16.mxu0 %v1039
    %1544 = vmatpush2.bf16.msra.mxu0 %v1038
    %1545 = vmatprep.subr.bf16.mxu0 %v1035
    %1546 = vmatpush2.bf16.msra.mxu0 %v1034
    %1547 = vmatprep.subr.bf16.mxu0 %v1031
    %1548 = vmatpush2.bf16.msra.mxu0 %v1030
    %1549 = vmatprep.subr.bf16.mxu0 %v1027
    %1550 = vmatpush2.bf16.msra.mxu0 %v1026
    %1551 = vmatprep.subr.bf16.mxu0 %v1023
    %1552 = vmatpush2.bf16.msra.mxu0 %v1022
    %1553 = vmatprep.subr.bf16.mxu0 %v1019
    %1554 = vmatpush2.bf16.msra.mxu0 %v1018
    %1555 = vmatprep.subr.bf16.mxu0 %v1015
    %1556 = vmatpush2.bf16.msra.mxu0 %v1014
    %1557 = vmatprep.mubr.bf16.mxu0 %v306
    %1558 = vmatmul.mubr.bf16.gmra.mxu0 %v305
    %v1559 = vpop.f32.mrf.mxu0
    %v1560 = vadd.f32 %v1519, %v1559
    %v1561 = vpop.f32.mrf.mxu0
    %v1562 = vadd.f32 %v1521, %v1561
    %v1563 = vpop.f32.mrf.mxu0
    %v1564 = vpop.f32.mrf.mxu0
    %1565 = vdwg.mxu0
    %1566 = vmatprep.subr.bf16.mxu0 %v1075
    %1567 = vmatpush1.bf16.msra.mxu0 %v1074
    %1568 = vmatprep.subr.bf16.mxu0 %v1071
    %1569 = vmatpush1.bf16.msra.mxu0 %v1070
    %1570 = vmatprep.subr.bf16.mxu0 %v1067
    %1571 = vmatpush1.bf16.msra.mxu0 %v1066
    %1572 = vmatprep.subr.bf16.mxu0 %v1063
    %1573 = vmatpush1.bf16.msra.mxu0 %v1062
    %1574 = vmatprep.subr.bf16.mxu0 %v1059
    %1575 = vmatpush1.bf16.msra.mxu0 %v1058
    %1576 = vmatprep.subr.bf16.mxu0 %v1055
    %1577 = vmatpush1.bf16.msra.mxu0 %v1054
    %1578 = vmatprep.subr.bf16.mxu0 %v1051
    %1579 = vmatpush1.bf16.msra.mxu0 %v1050
    %1580 = vmatprep.subr.bf16.mxu0 %v1047
    %1581 = vmatpush1.bf16.msra.mxu0 %v1046
    %1582 = vmatprep.subr.bf16.mxu0 %v1107
    %1583 = vmatpush2.bf16.msra.mxu0 %v1106
    %1584 = vmatprep.subr.bf16.mxu0 %v1103
    %1585 = vmatpush2.bf16.msra.mxu0 %v1102
    %1586 = vmatprep.subr.bf16.mxu0 %v1099
    %1587 = vmatpush2.bf16.msra.mxu0 %v1098
    %1588 = vmatprep.subr.bf16.mxu0 %v1095
    %1589 = vmatpush2.bf16.msra.mxu0 %v1094
    %1590 = vmatprep.subr.bf16.mxu0 %v1091
    %1591 = vmatpush2.bf16.msra.mxu0 %v1090
    %1592 = vmatprep.subr.bf16.mxu0 %v1087
    %1593 = vmatpush2.bf16.msra.mxu0 %v1086
    %1594 = vmatprep.subr.bf16.mxu0 %v1083
    %1595 = vmatpush2.bf16.msra.mxu0 %v1082
    %1596 = vmatprep.subr.bf16.mxu0 %v1079
    %1597 = vmatpush2.bf16.msra.mxu0 %v1078
    %1598 = vmatprep.mubr.bf16.mxu0 %v308
    %1599 = vmatmul.mubr.bf16.gmra.mxu0 %v307
    %v1600 = vpop.f32.mrf.mxu0
    %v1601 = vadd.f32 %v1560, %v1600
    %v1602 = vpop.f32.mrf.mxu0
    %v1603 = vadd.f32 %v1562, %v1602
    %v1604 = vpop.f32.mrf.mxu0
    %v1605 = vpop.f32.mrf.mxu0
    %1606 = vdwg.mxu0
    %1607 = vmatprep.subr.bf16.mxu0 0
    %1608 = vmatpush1.bf16.msra.mxu0 0
    %1609 = vmatprep.subr.bf16.mxu0 0
    %1610 = vmatpush1.bf16.msra.mxu0 0
    %1611 = vmatprep.subr.bf16.mxu0 0
    %1612 = vmatpush1.bf16.msra.mxu0 0
    %1613 = vmatprep.subr.bf16.mxu0 0
    %1614 = vmatpush1.bf16.msra.mxu0 0
    %1615 = vmatprep.subr.bf16.mxu0 0
    %1616 = vmatpush1.bf16.msra.mxu0 0
    %1617 = vmatprep.subr.bf16.mxu0 0
    %1618 = vmatpush1.bf16.msra.mxu0 0
    %1619 = vmatprep.subr.bf16.mxu0 %v1115
    %1620 = vmatpush1.bf16.msra.mxu0 %v1114
    %1621 = vmatprep.subr.bf16.mxu0 %v1111
    %1622 = vmatpush1.bf16.msra.mxu0 %v1110
    %1623 = vmatprep.subr.bf16.mxu0 0
    %1624 = vmatpush2.bf16.msra.mxu0 0
    %1625 = vmatprep.subr.bf16.mxu0 0
    %1626 = vmatpush2.bf16.msra.mxu0 0
    %1627 = vmatprep.subr.bf16.mxu0 0
    %1628 = vmatpush2.bf16.msra.mxu0 0
    %1629 = vmatprep.subr.bf16.mxu0 0
    %1630 = vmatpush2.bf16.msra.mxu0 0
    %1631 = vmatprep.subr.bf16.mxu0 0
    %1632 = vmatpush2.bf16.msra.mxu0 0
    %1633 = vmatprep.subr.bf16.mxu0 0
    %1634 = vmatpush2.bf16.msra.mxu0 0
    %1635 = vmatprep.subr.bf16.mxu0 0
    %1636 = vmatpush2.bf16.msra.mxu0 0
    %1637 = vmatprep.subr.bf16.mxu0 0
    %1638 = vmatpush2.bf16.msra.mxu0 0
    %1639 = vmatprep.mubr.bf16.mxu0 0
    %1640 = vmatmul.mubr.bf16.gmra.mxu0 %v1318
    %v1641 = vpop.f32.mrf.mxu0
    %v1642 = vadd.f32 %v1601, %v1641
    %v1643 = vpop.f32.mrf.mxu0
    %v1644 = vadd.f32 %v1603, %v1643
    %v1645 = vpop.f32.mrf.mxu0
    %v1646 = vpop.f32.mrf.mxu0
    %1647 = vdwg.mxu0
    %v1648 = vmax.f32 %v1478, 0.0
    %v1649 = vmax.f32 %v1480, 0.0
    %v1650 = vmax.f32 %v1642, 0.0
    %v1651 = vmax.f32 %v1644, 0.0
    %v1652 = vrot.slane %v1648, 4
    %v1653 = vadd.f32 %v1648, %v1652
    %v1654 = vrot.slane %v1653, 2
    %v1655 = vadd.f32 %v1653, %v1654
    %v1656 = vrot.slane %v1655, 1
    %v1657 = vadd.f32 %v1655, %v1656
    %v1658 = vrot.slane %v1649, 4
    %v1659 = vadd.f32 %v1649, %v1658
    %v1660 = vrot.slane %v1659, 2
    %v1661 = vadd.f32 %v1659, %v1660
    %v1662 = vrot.slane %v1661, 1
    %v1663 = vadd.f32 %v1661, %v1662
    %v1664 = vrot.slane %v1650, 4
    %v1665 = vadd.f32 %v1650, %v1664
    %v1666 = vrot.slane %v1665, 2
    %v1667 = vadd.f32 %v1665, %v1666
    %v1668 = vrot.slane %v1667, 1
    %v1669 = vadd.f32 %v1667, %v1668
    %vm1670 = vcmask 949248
    %v1671 = vsel %vm1670, %v1651, 0.0
    %v1672 = vrot.slane %v1671, 4
    %v1673 = vadd.f32 %v1671, %v1672
    %v1674 = vrot.slane %v1673, 2
    %v1675 = vadd.f32 %v1673, %v1674
    %v1676 = vrot.slane %v1675, 1
    %v1677 = vadd.f32 %v1675, %v1676
    %v1678 = vmul.f32 %v1657, 0.125
    %v1679 = vmul.f32 %v1663, 0.125
    %v1680 = vmul.f32 %v1669, 0.125
    %v1681 = vmul.f32 %v1677, 0.125
    %v1682 = vsub.f32 %v1648, %v1678
    %v1683 = vsub.f32 %v1649, %v1679
    %v1684 = vsub.f32 %v1650, %v1680
    %v1685 = vsub.f32 %v1651, %v1681
    %v1686 = vmul.f32 %v1682, %v1682
    %v1687 = vmul.f32 %v1683, %v1683
    %v1688 = vmul.f32 %v1684, %v1684
    %v1689 = vmul.f32 %v1685, %v1685
    %v1690 = vrot.slane %v1686, 4
    %v1691 = vadd.f32 %v1686, %v1690
    %v1692 = vrot.slane %v1691, 2
    %v1693 = vadd.f32 %v1691, %v1692
    %v1694 = vrot.slane %v1693, 1
    %v1695 = vadd.f32 %v1693, %v1694
    %v1696 = vrot.slane %v1687, 4
    %v1697 = vadd.f32 %v1687, %v1696
    %v1698 = vrot.slane %v1697, 2
    %v1699 = vadd.f32 %v1697, %v1698
    %v1700 = vrot.slane %v1699, 1
    %v1701 = vadd.f32 %v1699, %v1700
    %v1702 = vrot.slane %v1688, 4
    %v1703 = vadd.f32 %v1688, %v1702
    %v1704 = vrot.slane %v1703, 2
    %v1705 = vadd.f32 %v1703, %v1704
    %v1706 = vrot.slane %v1705, 1
    %v1707 = vadd.f32 %v1705, %v1706
    %v1708 = vsel %vm1670, %v1689, 0.0
    %v1709 = vrot.slane %v1708, 4
    %v1710 = vadd.f32 %v1708, %v1709
    %v1711 = vrot.slane %v1710, 2
    %v1712 = vadd.f32 %v1710, %v1711
    %v1713 = vrot.slane %v1712, 1
    %v1714 = vadd.f32 %v1712, %v1713
    %v1715 = vmul.f32 %v1695, 0.125
    %v1716 = vmul.f32 %v1701, 0.125
    %v1717 = vmul.f32 %v1707, 0.125
    %v1718 = vmul.f32 %v1714, 0.125
    %v1719 = vadd.f32 %v1715, 1e-05
    %v1720 = vadd.f32 %v1716, 1e-05
    %v1721 = vadd.f32 %v1717, 1e-05
    %v1722 = vadd.f32 %v1718, 1e-05
    %v1723 = vrsqrt.pop %v1719
    %v1724 = vrsqrt.pop %v1720
    %v1725 = vrsqrt.pop %v1721
    %v1726 = vrsqrt.pop %v1722
    %v1731 = vcombine.low %v1723, %v1724
    %v1732 = vcombine.low %v1725, %v1726
    %v1733 = vrot.slane %v1731, 7
    %v1734 = vrot.slane %v1732, 7
    %v1737 = vmul.f32 %v52, %v1733
    %v1738 = vmul.f32 %v53, %v1734
    %v1741 = vlaneseq
    %v1742 = vshrl.u32 %v1741, 7
    %v1743 = vsub.s32 1, %v1742
    %v1744 = vrot.slane %v1737, %v1743
    %v1745 = vlaneseq
    %v1746 = vshrl.u32 %v1745, 7
    %v1747 = vsub.s32 5, %v1746
    %v1748 = vrot.slane %v1737, %v1747
    %v1749 = vlaneseq
    %v1750 = vshrl.u32 %v1749, 7
    %v1751 = vsub.s32 1, %v1750
    %v1752 = vrot.slane %v1738, %v1751
    %v1753 = vlaneseq
    %v1754 = vshrl.u32 %v1753, 7
    %v1755 = vsub.s32 5, %v1754
    %v1756 = vrot.slane %v1738, %v1755
    %v1761 = vlaneseq
    %v1762 = vshrl.u32 %v1761, 7
    %v1763 = vsub.s32 1, %v1762
    %v1764 = vrot.slane %v1744, %v1763
    %v1765 = vlaneseq
    %v1766 = vshrl.u32 %v1765, 7
    %v1767 = vsub.s32 1, %v1766
    %v1768 = vrot.slane %v1748, %v1767
    %v1769 = vlaneseq
    %v1770 = vshrl.u32 %v1769, 7
    %v1771 = vsub.s32 1, %v1770
    %v1772 = vrot.slane %v1752, %v1771
    %v1773 = vlaneseq
    %v1774 = vshrl.u32 %v1773, 7
    %v1775 = vsub.s32 1, %v1774
    %v1776 = vrot.slane %v1756, %v1775
    %v1777 = vmul.f32 %v1682, %v1764
    %v1778 = vmul.f32 %v1683, %v1768
    %v1779 = vmul.f32 %v1684, %v1772
    %v1780 = vmul.f32 %v1685, %v1776
    %v1781 = vlaneseq
    %v1782 = vshrl.u32 %v1781, 7
    %v1783 = vsub.s32 2, %v1782
    %v1784 = vrot.slane %v52, %v1783
    %v1785 = vlaneseq
    %v1786 = vshrl.u32 %v1785, 7
    %v1787 = vsub.s32 6, %v1786
    %v1788 = vrot.slane %v52, %v1787
    %v1789 = vlaneseq
    %v1790 = vshrl.u32 %v1789, 7
    %v1791 = vsub.s32 2, %v1790
    %v1792 = vrot.slane %v53, %v1791
    %v1793 = vlaneseq
    %v1794 = vshrl.u32 %v1793, 7
    %v1795 = vsub.s32 6, %v1794
    %v1796 = vrot.slane %v53, %v1795
    %v1801 = vlaneseq
    %v1802 = vshrl.u32 %v1801, 7
    %v1803 = vsub.s32 2, %v1802
    %v1804 = vrot.slane %v1784, %v1803
    %v1805 = vlaneseq
    %v1806 = vshrl.u32 %v1805, 7
    %v1807 = vsub.s32 2, %v1806
    %v1808 = vrot.slane %v1788, %v1807
    %v1809 = vlaneseq
    %v1810 = vshrl.u32 %v1809, 7
    %v1811 = vsub.s32 2, %v1810
    %v1812 = vrot.slane %v1792, %v1811
    %v1813 = vlaneseq
    %v1814 = vshrl.u32 %v1813, 7
    %v1815 = vsub.s32 2, %v1814
    %v1816 = vrot.slane %v1796, %v1815
    %v1817 = vadd.f32 %v1777, %v1804
    %v1818 = vadd.f32 %v1778, %v1808
    %v1819 = vadd.f32 %v1779, %v1812
    %v1820 = vadd.f32 %v1780, %v1816
    %v1821 = vpack.c.bf16 %v1817, %v1817
    %v1822 = vpack.c.bf16 %v1818, %v1818
    %v1823 = vpack.c.bf16 %v1819, %v1819
    %v1824 = vpack.c.bf16 %v1820, %v1820
    %v1825 = vld [vmem:[%s4] sm:$0x77]
    %v1826 = vld [vmem:[%s3] sm:$0xff]
    %v1827 = vld [vmem:[%s3 + $0x8] sm:$0xff]
    %v1828 = vld [vmem:[%s3 + $0x10] sm:$0xff]
    %v1829 = vld [vmem:[%s3 + $0x18] sm:$0xff]
    %v1830 = vld [vmem:[%s3 + $0x20] sm:$0xff]
    %v1831 = vld [vmem:[%s3 + $0x28] sm:$0xff]
    %v1832 = vld [vmem:[%s3 + $0x30] sm:$0xff]
    %v1833 = vld [vmem:[%s3 + $0x38] sm:$0xff]
    %v1834 = vld [vmem:[%s3 + $0x40] sm:$0xff]
    %v1835 = vld [vmem:[%s3 + $0x48] sm:$0xff]
    %v1836 = vld [vmem:[%s3 + $0x50] sm:$0xff]
    %v1837 = vld [vmem:[%s3 + $0x58] sm:$0xff]
    %v1838 = vld [vmem:[%s3 + $0x60] sm:$0xff]
    %v1839 = vld [vmem:[%s3 + $0x68] sm:$0xff]
    %v1840 = vld [vmem:[%s3 + $0x70] sm:$0xff]
    %v1841 = vld [vmem:[%s3 + $0x78] sm:$0xff]
    %v1842 = vld [vmem:[%s3 + $0x80] sm:$0xff]
    %v1843 = vld [vmem:[%s3 + $0x88] sm:$0xff]
    %v1844 = vld [vmem:[%s3 + $0x90] sm:$0xff]
    %v1845 = vld [vmem:[%s3 + $0x98] sm:$0xff]
    %v1846 = vld [vmem:[%s3 + $0xa0] sm:$0xff]
    %v1847 = vld [vmem:[%s3 + $0xa8] sm:$0xff]
    %v1848 = vld [vmem:[%s3 + $0xb0] sm:$0xff]
    %v1849 = vld [vmem:[%s3 + $0xb8] sm:$0xff]
    %v1850 = vld [vmem:[%s3 + $0xc0] sm:$0xff]
    %v1851 = vld [vmem:[%s3 + $0xc8] sm:$0xff]
    %v1852 = vld [vmem:[%s3 + $0xd0] sm:$0xff]
    %v1853 = vld [vmem:[%s3 + $0xd8] sm:$0xff]
    %v1854 = vld [vmem:[%s3 + $0xe0] sm:$0xff]
    %v1855 = vld [vmem:[%s3 + $0xe8] sm:$0xff]
    %v1856 = vld [vmem:[%s3 + $0xf0] sm:$0xff]
    %v1857 = vld [vmem:[%s3 + $0xf8] sm:$0xff]
    %v1858 = vld [vmem:[%s3 + $0x100] sm:$0xff]
    %v1859 = vld [vmem:[%s3 + $0x108] sm:$0xff]
    %v1860 = vld [vmem:[%s3 + $0x110] sm:$0xff]
    %v1861 = vld [vmem:[%s3 + $0x118] sm:$0xff]
    %v1862 = vld [vmem:[%s3 + $0x120] sm:$0xff]
    %v1863 = vld [vmem:[%s3 + $0x128] sm:$0xff]
    %v1864 = vld [vmem:[%s3 + $0x130] sm:$0xff]
    %v1865 = vld [vmem:[%s3 + $0x138] sm:$0xff]
    %v1866 = vld [vmem:[%s3 + $0x140] sm:$0xff]
    %v1867 = vld [vmem:[%s3 + $0x148] sm:$0xff]
    %v1868 = vld [vmem:[%s3 + $0x150] sm:$0xff]
    %v1869 = vld [vmem:[%s3 + $0x158] sm:$0xff]
    %v1870 = vld [vmem:[%s3 + $0x160] sm:$0xff]
    %v1871 = vld [vmem:[%s3 + $0x168] sm:$0xff]
    %v1872 = vld [vmem:[%s3 + $0x170] sm:$0xff]
    %v1873 = vld [vmem:[%s3 + $0x178] sm:$0xff]
    %v1874 = vld [vmem:[%s3 + $0x180] sm:$0xff]
    %v1875 = vld [vmem:[%s3 + $0x188] sm:$0xff]
    %v1876 = vld [vmem:[%s3 + $0x190] sm:$0xff]
    %v1877 = vld [vmem:[%s3 + $0x198] sm:$0xff]
    %v1878 = vld [vmem:[%s3 + $0x1a0] sm:$0xff]
    %v1879 = vld [vmem:[%s3 + $0x1a8] sm:$0xff]
    %v1880 = vld [vmem:[%s3 + $0x1b0] sm:$0xff]
    %v1881 = vld [vmem:[%s3 + $0x1b8] sm:$0xff]
    %v1882 = vld [vmem:[%s3 + $0x1c0] sm:$0xff]
    %v1883 = vld [vmem:[%s3 + $0x1c8] sm:$0xff]
    %v1884 = vld [vmem:[%s3 + $0x1d0] sm:$0xff]
    %v1885 = vld [vmem:[%s3 + $0x1d8] sm:$0xff]
    %v1886 = vld [vmem:[%s3 + $0x1e0] sm:$0xff]
    %v1887 = vld [vmem:[%s3 + $0x1e8] sm:$0xff]
    %v1888 = vld [vmem:[%s3 + $0x1f0] sm:$0x33]
    %v1890 = vlaneseq
    %v1891 = vshrl.u32 %v1890, 7
    %v1892 = vsub.s32 0, %v1891
    %v1893 = vrot.slane %v1825, %v1892
    %v1894 = vlaneseq
    %v1895 = vshrl.u32 %v1894, 7
    %v1896 = vsub.s32 4, %v1895
    %v1897 = vrot.slane %v1825, %v1896
    %v1900 = vlaneseq
    %v1901 = vshrl.u32 %v1900, 7
    %v1902 = vsub.s32 0, %v1901
    %v1903 = vrot.slane %v1893, %v1902
    %v1904 = vlaneseq
    %v1905 = vshrl.u32 %v1904, 7
    %v1906 = vsub.s32 0, %v1905
    %v1907 = vrot.slane %v1897, %v1906
    %v1971 = vunpack.c.l.b16 %v1826
    %v1972 = vunpack.c.h.b16 %v1826
    %v1973 = vunpack.c.l.b16 %v1827
    %v1974 = vunpack.c.h.b16 %v1827
    %v1975 = vunpack.c.l.b16 %v1828
    %v1976 = vunpack.c.h.b16 %v1828
    %v1977 = vunpack.c.l.b16 %v1829
    %v1978 = vunpack.c.h.b16 %v1829
    %v1979 = vunpack.c.l.b16 %v1830
    %v1980 = vunpack.c.h.b16 %v1830
    %v1981 = vunpack.c.l.b16 %v1831
    %v1982 = vunpack.c.h.b16 %v1831
    %v1983 = vunpack.c.l.b16 %v1832
    %v1984 = vunpack.c.h.b16 %v1832
    %v1985 = vunpack.c.l.b16 %v1833
    %v1986 = vunpack.c.h.b16 %v1833
    %v1987 = vunpack.c.l.b16 %v1834
    %v1988 = vunpack.c.h.b16 %v1834
    %v1989 = vunpack.c.l.b16 %v1835
    %v1990 = vunpack.c.h.b16 %v1835
    %v1991 = vunpack.c.l.b16 %v1836
    %v1992 = vunpack.c.h.b16 %v1836
    %v1993 = vunpack.c.l.b16 %v1837
    %v1994 = vunpack.c.h.b16 %v1837
    %v1995 = vunpack.c.l.b16 %v1838
    %v1996 = vunpack.c.h.b16 %v1838
    %v1997 = vunpack.c.l.b16 %v1839
    %v1998 = vunpack.c.h.b16 %v1839
    %v1999 = vunpack.c.l.b16 %v1840
    %v2000 = vunpack.c.h.b16 %v1840
    %v2001 = vunpack.c.l.b16 %v1841
    %v2002 = vunpack.c.h.b16 %v1841
    %v2003 = vunpack.c.l.b16 %v1842
    %v2004 = vunpack.c.h.b16 %v1842
    %v2005 = vunpack.c.l.b16 %v1843
    %v2006 = vunpack.c.h.b16 %v1843
    %v2007 = vunpack.c.l.b16 %v1844
    %v2008 = vunpack.c.h.b16 %v1844
    %v2009 = vunpack.c.l.b16 %v1845
    %v2010 = vunpack.c.h.b16 %v1845
    %v2011 = vunpack.c.l.b16 %v1846
    %v2012 = vunpack.c.h.b16 %v1846
    %v2013 = vunpack.c.l.b16 %v1847
    %v2014 = vunpack.c.h.b16 %v1847
    %v2015 = vunpack.c.l.b16 %v1848
    %v2016 = vunpack.c.h.b16 %v1848
    %v2017 = vunpack.c.l.b16 %v1849
    %v2018 = vunpack.c.h.b16 %v1849
    %v2019 = vunpack.c.l.b16 %v1850
    %v2020 = vunpack.c.h.b16 %v1850
    %v2021 = vunpack.c.l.b16 %v1851
    %v2022 = vunpack.c.h.b16 %v1851
    %v2023 = vunpack.c.l.b16 %v1852
    %v2024 = vunpack.c.h.b16 %v1852
    %v2025 = vunpack.c.l.b16 %v1853
    %v2026 = vunpack.c.h.b16 %v1853
    %v2027 = vunpack.c.l.b16 %v1854
    %v2028 = vunpack.c.h.b16 %v1854
    %v2029 = vunpack.c.l.b16 %v1855
    %v2030 = vunpack.c.h.b16 %v1855
    %v2031 = vunpack.c.l.b16 %v1856
    %v2032 = vunpack.c.h.b16 %v1856
    %v2033 = vunpack.c.l.b16 %v1857
    %v2034 = vunpack.c.h.b16 %v1857
    %v2035 = vunpack.c.l.b16 %v1858
    %v2036 = vunpack.c.h.b16 %v1858
    %v2037 = vunpack.c.l.b16 %v1859
    %v2038 = vunpack.c.h.b16 %v1859
    %v2039 = vunpack.c.l.b16 %v1860
    %v2040 = vunpack.c.h.b16 %v1860
    %v2041 = vunpack.c.l.b16 %v1861
    %v2042 = vunpack.c.h.b16 %v1861
    %v2043 = vunpack.c.l.b16 %v1862
    %v2044 = vunpack.c.h.b16 %v1862
    %v2045 = vunpack.c.l.b16 %v1863
    %v2046 = vunpack.c.h.b16 %v1863
    %v2047 = vunpack.c.l.b16 %v1864
    %v2048 = vunpack.c.h.b16 %v1864
    %v2049 = vunpack.c.l.b16 %v1865
    %v2050 = vunpack.c.h.b16 %v1865
    %v2051 = vunpack.c.l.b16 %v1866
    %v2052 = vunpack.c.h.b16 %v1866
    %v2053 = vunpack.c.l.b16 %v1867
    %v2054 = vunpack.c.h.b16 %v1867
    %v2055 = vunpack.c.l.b16 %v1868
    %v2056 = vunpack.c.h.b16 %v1868
    %v2057 = vunpack.c.l.b16 %v1869
    %v2058 = vunpack.c.h.b16 %v1869
    %v2059 = vunpack.c.l.b16 %v1870
    %v2060 = vunpack.c.h.b16 %v1870
    %v2061 = vunpack.c.l.b16 %v1871
    %v2062 = vunpack.c.h.b16 %v1871
    %v2063 = vunpack.c.l.b16 %v1872
    %v2064 = vunpack.c.h.b16 %v1872
    %v2065 = vunpack.c.l.b16 %v1873
    %v2066 = vunpack.c.h.b16 %v1873
    %v2067 = vunpack.c.l.b16 %v1874
    %v2068 = vunpack.c.h.b16 %v1874
    %v2069 = vunpack.c.l.b16 %v1875
    %v2070 = vunpack.c.h.b16 %v1875
    %v2071 = vunpack.c.l.b16 %v1876
    %v2072 = vunpack.c.h.b16 %v1876
    %v2073 = vunpack.c.l.b16 %v1877
    %v2074 = vunpack.c.h.b16 %v1877
    %v2075 = vunpack.c.l.b16 %v1878
    %v2076 = vunpack.c.h.b16 %v1878
    %v2077 = vunpack.c.l.b16 %v1879
    %v2078 = vunpack.c.h.b16 %v1879
    %v2079 = vunpack.c.l.b16 %v1880
    %v2080 = vunpack.c.h.b16 %v1880
    %v2081 = vunpack.c.l.b16 %v1881
    %v2082 = vunpack.c.h.b16 %v1881
    %v2083 = vunpack.c.l.b16 %v1882
    %v2084 = vunpack.c.h.b16 %v1882
    %v2085 = vunpack.c.l.b16 %v1883
    %v2086 = vunpack.c.h.b16 %v1883
    %v2087 = vunpack.c.l.b16 %v1884
    %v2088 = vunpack.c.h.b16 %v1884
    %v2089 = vunpack.c.l.b16 %v1885
    %v2090 = vunpack.c.h.b16 %v1885
    %v2091 = vunpack.c.l.b16 %v1886
    %v2092 = vunpack.c.h.b16 %v1886
    %v2093 = vunpack.c.l.b16 %v1887
    %v2094 = vunpack.c.h.b16 %v1887
    %v2095 = vunpack.c.l.b16 %v1888
    %v2096 = vunpack.c.h.b16 %v1888
    %v2097 = vpack.c.b16 %v1973, %v1971
    %v2098 = vpack.c.b16 %v1974, %v1972
    %v2099 = vpack.c.b16 %v1977, %v1975
    %v2100 = vpack.c.b16 %v1978, %v1976
    %v2101 = vpack.c.b16 %v1981, %v1979
    %v2102 = vpack.c.b16 %v1982, %v1980
    %v2103 = vpack.c.b16 %v1985, %v1983
    %v2104 = vpack.c.b16 %v1986, %v1984
    %v2105 = vpack.c.b16 %v1989, %v1987
    %v2106 = vpack.c.b16 %v1990, %v1988
    %v2107 = vpack.c.b16 %v1993, %v1991
    %v2108 = vpack.c.b16 %v1994, %v1992
    %v2109 = vpack.c.b16 %v1997, %v1995
    %v2110 = vpack.c.b16 %v1998, %v1996
    %v2111 = vpack.c.b16 %v2001, %v1999
    %v2112 = vpack.c.b16 %v2002, %v2000
    %v2113 = vpack.c.b16 %v2005, %v2003
    %v2114 = vpack.c.b16 %v2006, %v2004
    %v2115 = vpack.c.b16 %v2009, %v2007
    %v2116 = vpack.c.b16 %v2010, %v2008
    %v2117 = vpack.c.b16 %v2013, %v2011
    %v2118 = vpack.c.b16 %v2014, %v2012
    %v2119 = vpack.c.b16 %v2017, %v2015
    %v2120 = vpack.c.b16 %v2018, %v2016
    %v2121 = vpack.c.b16 %v2021, %v2019
    %v2122 = vpack.c.b16 %v2022, %v2020
    %v2123 = vpack.c.b16 %v2025, %v2023
    %v2124 = vpack.c.b16 %v2026, %v2024
    %v2125 = vpack.c.b16 %v2029, %v2027
    %v2126 = vpack.c.b16 %v2030, %v2028
    %v2127 = vpack.c.b16 %v2033, %v2031
    %v2128 = vpack.c.b16 %v2034, %v2032
    %v2129 = vpack.c.b16 %v2037, %v2035
    %v2130 = vpack.c.b16 %v2038, %v2036
    %v2131 = vpack.c.b16 %v2041, %v2039
    %v2132 = vpack.c.b16 %v2042, %v2040
    %v2133 = vpack.c.b16 %v2045, %v2043
    %v2134 = vpack.c.b16 %v2046, %v2044
    %v2135 = vpack.c.b16 %v2049, %v2047
    %v2136 = vpack.c.b16 %v2050, %v2048
    %v2137 = vpack.c.b16 %v2053, %v2051
    %v2138 = vpack.c.b16 %v2054, %v2052
    %v2139 = vpack.c.b16 %v2057, %v2055
    %v2140 = vpack.c.b16 %v2058, %v2056
    %v2141 = vpack.c.b16 %v2061, %v2059
    %v2142 = vpack.c.b16 %v2062, %v2060
    %v2143 = vpack.c.b16 %v2065, %v2063
    %v2144 = vpack.c.b16 %v2066, %v2064
    %v2145 = vpack.c.b16 %v2069, %v2067
    %v2146 = vpack.c.b16 %v2070, %v2068
    %v2147 = vpack.c.b16 %v2073, %v2071
    %v2148 = vpack.c.b16 %v2074, %v2072
    %v2149 = vpack.c.b16 %v2077, %v2075
    %v2150 = vpack.c.b16 %v2078, %v2076
    %v2151 = vpack.c.b16 %v2081, %v2079
    %v2152 = vpack.c.b16 %v2082, %v2080
    %v2153 = vpack.c.b16 %v2085, %v2083
    %v2154 = vpack.c.b16 %v2086, %v2084
    %v2155 = vpack.c.b16 %v2089, %v2087
    %v2156 = vpack.c.b16 %v2090, %v2088
    %v2157 = vpack.c.b16 %v2093, %v2091
    %v2158 = vpack.c.b16 %v2094, %v2092
    %v2159 = vpack.c.b16 %v2095, %v2095
    %v2160 = vpack.c.b16 %v2096, %v2096
    %v2224 = vsel %vm1670, %v1824, 0
    %vm2226 = vcmask 1041408
    %v2228 = vsel %vm2226, %v2159, 0
    %v2231 = vsel %vm2226, %v2160, 0
    %2233 = vmatprep.subr.bf16.mxu0 %v2112
    %2234 = vmatpush1.bf16.msra.mxu0 %v2111
    %2235 = vmatprep.subr.bf16.mxu0 %v2110
    %2236 = vmatpush1.bf16.msra.mxu0 %v2109
    %2237 = vmatprep.subr.bf16.mxu0 %v2108
    %2238 = vmatpush1.bf16.msra.mxu0 %v2107
    %2239 = vmatprep.subr.bf16.mxu0 %v2106
    %2240 = vmatpush1.bf16.msra.mxu0 %v2105
    %2241 = vmatprep.subr.bf16.mxu0 %v2104
    %2242 = vmatpush1.bf16.msra.mxu0 %v2103
    %2243 = vmatprep.subr.bf16.mxu0 %v2102
    %2244 = vmatpush1.bf16.msra.mxu0 %v2101
    %2245 = vmatprep.subr.bf16.mxu0 %v2100
    %2246 = vmatpush1.bf16.msra.mxu0 %v2099
    %2247 = vmatprep.subr.bf16.mxu0 %v2098
    %2248 = vmatpush1.bf16.msra.mxu0 %v2097
    %2249 = vmatprep.subr.bf16.mxu0 %v2128
    %2250 = vmatpush2.bf16.msra.mxu0 %v2127
    %2251 = vmatprep.subr.bf16.mxu0 %v2126
    %2252 = vmatpush2.bf16.msra.mxu0 %v2125
    %2253 = vmatprep.subr.bf16.mxu0 %v2124
    %2254 = vmatpush2.bf16.msra.mxu0 %v2123
    %2255 = vmatprep.subr.bf16.mxu0 %v2122
    %2256 = vmatpush2.bf16.msra.mxu0 %v2121
    %2257 = vmatprep.subr.bf16.mxu0 %v2120
    %2258 = vmatpush2.bf16.msra.mxu0 %v2119
    %2259 = vmatprep.subr.bf16.mxu0 %v2118
    %2260 = vmatpush2.bf16.msra.mxu0 %v2117
    %2261 = vmatprep.subr.bf16.mxu0 %v2116
    %2262 = vmatpush2.bf16.msra.mxu0 %v2115
    %2263 = vmatprep.subr.bf16.mxu0 %v2114
    %2264 = vmatpush2.bf16.msra.mxu0 %v2113
    %2265 = vmatprep.mubr.bf16.mxu0 %v1822
    %2266 = vmatmul.mubr.bf16.gmra.mxu0 %v1821
    %v2267 = vpop.f32.mrf.mxu0
    %v2268 = vadd.f32 %v1903, %v2267
    %v2269 = vpop.f32.mrf.mxu0
    %v2270 = vadd.f32 %v1907, %v2269
    %v2271 = vpop.f32.mrf.mxu0
    %v2272 = vpop.f32.mrf.mxu0
    %2273 = vdwg.mxu0
    %2274 = vmatprep.subr.bf16.mxu0 %v2144
    %2275 = vmatpush1.bf16.msra.mxu0 %v2143
    %2276 = vmatprep.subr.bf16.mxu0 %v2142
    %2277 = vmatpush1.bf16.msra.mxu0 %v2141
    %2278 = vmatprep.subr.bf16.mxu0 %v2140
    %2279 = vmatpush1.bf16.msra.mxu0 %v2139
    %2280 = vmatprep.subr.bf16.mxu0 %v2138
    %2281 = vmatpush1.bf16.msra.mxu0 %v2137
    %2282 = vmatprep.subr.bf16.mxu0 %v2136
    %2283 = vmatpush1.bf16.msra.mxu0 %v2135
    %2284 = vmatprep.subr.bf16.mxu0 %v2134
    %2285 = vmatpush1.bf16.msra.mxu0 %v2133
    %2286 = vmatprep.subr.bf16.mxu0 %v2132
    %2287 = vmatpush1.bf16.msra.mxu0 %v2131
    %2288 = vmatprep.subr.bf16.mxu0 %v2130
    %2289 = vmatpush1.bf16.msra.mxu0 %v2129
    %2290 = vmatprep.subr.bf16.mxu0 %v2231
    %2291 = vmatpush2.bf16.msra.mxu0 %v2228
    %2292 = vmatprep.subr.bf16.mxu0 %v2158
    %2293 = vmatpush2.bf16.msra.mxu0 %v2157
    %2294 = vmatprep.subr.bf16.mxu0 %v2156
    %2295 = vmatpush2.bf16.msra.mxu0 %v2155
    %2296 = vmatprep.subr.bf16.mxu0 %v2154
    %2297 = vmatpush2.bf16.msra.mxu0 %v2153
    %2298 = vmatprep.subr.bf16.mxu0 %v2152
    %2299 = vmatpush2.bf16.msra.mxu0 %v2151
    %2300 = vmatprep.subr.bf16.mxu0 %v2150
    %2301 = vmatpush2.bf16.msra.mxu0 %v2149
    %2302 = vmatprep.subr.bf16.mxu0 %v2148
    %2303 = vmatpush2.bf16.msra.mxu0 %v2147
    %2304 = vmatprep.subr.bf16.mxu0 %v2146
    %2305 = vmatpush2.bf16.msra.mxu0 %v2145
    %2306 = vmatprep.mubr.bf16.mxu0 %v2224
    %2307 = vmatmul.mubr.bf16.gmra.mxu0 %v1823
    %v2308 = vpop.f32.mrf.mxu0
    %v2309 = vadd.f32 %v2268, %v2308
    %v2310 = vpop.f32.mrf.mxu0
    %v2311 = vadd.f32 %v2270, %v2310
    %v2312 = vpop.f32.mrf.mxu0
    %v2313 = vpop.f32.mrf.mxu0
    %2314 = vdwg.mxu0
    %v2315 = vmax.f32 %v2309, 0.0
    %v2316 = vmax.f32 %v2311, 0.0
    %v2317 = vrot.slane %v2315, 4
    %v2318 = vadd.f32 %v2315, %v2317
    %v2319 = vrot.slane %v2318, 2
    %v2320 = vadd.f32 %v2318, %v2319
    %v2321 = vrot.slane %v2320, 1
    %v2322 = vadd.f32 %v2320, %v2321
    %vm2323 = vcmask 588800
    %v2324 = vsel %vm2323, %v2316, 0.0
    %v2325 = vrot.slane %v2324, 4
    %v2326 = vadd.f32 %v2324, %v2325
    %v2327 = vrot.slane %v2326, 2
    %v2328 = vadd.f32 %v2326, %v2327
    %v2329 = vrot.slane %v2328, 1
    %v2330 = vadd.f32 %v2328, %v2329
    %v2331 = vmul.f32 %v2322, 0.125
    %v2332 = vmul.f32 %v2330, 0.125
    %v2333 = vsub.f32 %v2315, %v2331
    %v2334 = vsub.f32 %v2316, %v2332
    %v2335 = vmul.f32 %v2333, %v2333
    %v2336 = vmul.f32 %v2334, %v2334
    %v2337 = vrot.slane %v2335, 4
    %v2338 = vadd.f32 %v2335, %v2337
    %v2339 = vrot.slane %v2338, 2
    %v2340 = vadd.f32 %v2338, %v2339
    %v2341 = vrot.slane %v2340, 1
    %v2342 = vadd.f32 %v2340, %v2341
    %v2343 = vsel %vm2323, %v2336, 0.0
    %v2344 = vrot.slane %v2343, 4
    %v2345 = vadd.f32 %v2343, %v2344
    %v2346 = vrot.slane %v2345, 2
    %v2347 = vadd.f32 %v2345, %v2346
    %v2348 = vrot.slane %v2347, 1
    %v2349 = vadd.f32 %v2347, %v2348
    %v2350 = vmul.f32 %v2342, 0.125
    %v2351 = vmul.f32 %v2349, 0.125
    %v2352 = vadd.f32 %v2350, 1e-05
    %v2353 = vadd.f32 %v2351, 1e-05
    %v2354 = vrsqrt.pop %v2352
    %v2355 = vrsqrt.pop %v2353
    %v2358 = vcombine.low %v2354, %v2355
    %v2359 = vrot.slane %v2358, 7
    %v2361 = vmul.f32 %v1825, %v2359
    %v2363 = vlaneseq
    %v2364 = vshrl.u32 %v2363, 7
    %v2365 = vsub.s32 1, %v2364
    %v2366 = vrot.slane %v2361, %v2365
    %v2367 = vlaneseq
    %v2368 = vshrl.u32 %v2367, 7
    %v2369 = vsub.s32 5, %v2368
    %v2370 = vrot.slane %v2361, %v2369
    %v2373 = vlaneseq
    %v2374 = vshrl.u32 %v2373, 7
    %v2375 = vsub.s32 1, %v2374
    %v2376 = vrot.slane %v2366, %v2375
    %v2377 = vlaneseq
    %v2378 = vshrl.u32 %v2377, 7
    %v2379 = vsub.s32 1, %v2378
    %v2380 = vrot.slane %v2370, %v2379
    %v2381 = vmul.f32 %v2333, %v2376
    %v2382 = vmul.f32 %v2334, %v2380
    %v2383 = vlaneseq
    %v2384 = vshrl.u32 %v2383, 7
    %v2385 = vsub.s32 2, %v2384
    %v2386 = vrot.slane %v1825, %v2385
    %v2387 = vlaneseq
    %v2388 = vshrl.u32 %v2387, 7
    %v2389 = vsub.s32 6, %v2388
    %v2390 = vrot.slane %v1825, %v2389
    %v2393 = vlaneseq
    %v2394 = vshrl.u32 %v2393, 7
    %v2395 = vsub.s32 2, %v2394
    %v2396 = vrot.slane %v2386, %v2395
    %v2397 = vlaneseq
    %v2398 = vshrl.u32 %v2397, 7
    %v2399 = vsub.s32 2, %v2398
    %v2400 = vrot.slane %v2390, %v2399
    %v2401 = vadd.f32 %v2381, %v2396
    %v2402 = vadd.f32 %v2382, %v2400
    %v2403 = vpack.c.bf16 %v2401, %v2401
    %v2404 = vpack.c.bf16 %v2402, %v2402
    %v2405 = vld [vmem:[%s6] sm:$0x7]
    %v2406 = vld [vmem:[%s5] sm:$0xf]
    %v2407 = vld [vmem:[%s5 + $0x4] sm:$0xf]
    %v2408 = vld [vmem:[%s5 + $0x8] sm:$0xf]
    %v2409 = vld [vmem:[%s5 + $0xc] sm:$0xf]
    %v2410 = vld [vmem:[%s5 + $0x10] sm:$0xf]
    %v2411 = vld [vmem:[%s5 + $0x14] sm:$0xf]
    %v2412 = vld [vmem:[%s5 + $0x18] sm:$0xf]
    %v2413 = vld [vmem:[%s5 + $0x1c] sm:$0xf]
    %v2414 = vld [vmem:[%s5 + $0x20] sm:$0xf]
    %v2415 = vld [vmem:[%s5 + $0x24] sm:$0xf]
    %v2416 = vld [vmem:[%s5 + $0x28] sm:$0xf]
    %v2417 = vld [vmem:[%s5 + $0x2c] sm:$0xf]
    %v2418 = vld [vmem:[%s5 + $0x30] sm:$0xf]
    %v2419 = vld [vmem:[%s5 + $0x34] sm:$0xf]
    %v2420 = vld [vmem:[%s5 + $0x38] sm:$0xf]
    %v2421 = vld [vmem:[%s5 + $0x3c] sm:$0xf]
    %v2422 = vld [vmem:[%s5 + $0x40] sm:$0xf]
    %v2423 = vld [vmem:[%s5 + $0x44] sm:$0xf]
    %v2424 = vld [vmem:[%s5 + $0x48] sm:$0xf]
    %v2425 = vld [vmem:[%s5 + $0x4c] sm:$0xf]
    %v2426 = vld [vmem:[%s5 + $0x50] sm:$0xf]
    %v2427 = vld [vmem:[%s5 + $0x54] sm:$0xf]
    %v2428 = vld [vmem:[%s5 + $0x58] sm:$0xf]
    %v2429 = vld [vmem:[%s5 + $0x5c] sm:$0xf]
    %v2430 = vld [vmem:[%s5 + $0x60] sm:$0xf]
    %v2431 = vlaneseq
    %v2432 = vshrl.u32 %v2431, 7
    %v2433 = vsub.s32 0, %v2432
    %v2434 = vrot.slane %v2405, %v2433
    %v2460 = vunpack.c.l.b16 %v2406
    %v2461 = vunpack.c.l.b16 %v2407
    %v2462 = vunpack.c.l.b16 %v2408
    %v2463 = vunpack.c.l.b16 %v2409
    %v2464 = vunpack.c.l.b16 %v2410
    %v2465 = vunpack.c.l.b16 %v2411
    %v2466 = vunpack.c.l.b16 %v2412
    %v2467 = vunpack.c.l.b16 %v2413
    %v2468 = vunpack.c.l.b16 %v2414
    %v2469 = vunpack.c.l.b16 %v2415
    %v2470 = vunpack.c.l.b16 %v2416
    %v2471 = vunpack.c.l.b16 %v2417
    %v2472 = vunpack.c.l.b16 %v2418
    %v2473 = vunpack.c.l.b16 %v2419
    %v2474 = vunpack.c.l.b16 %v2420
    %v2475 = vunpack.c.l.b16 %v2421
    %v2476 = vunpack.c.l.b16 %v2422
    %v2477 = vunpack.c.l.b16 %v2423
    %v2478 = vunpack.c.l.b16 %v2424
    %v2479 = vunpack.c.l.b16 %v2425
    %v2480 = vunpack.c.l.b16 %v2426
    %v2481 = vunpack.c.l.b16 %v2427
    %v2482 = vunpack.c.l.b16 %v2428
    %v2483 = vunpack.c.l.b16 %v2429
    %v2484 = vunpack.c.l.b16 %v2430
    %v2485 = vpack.c.b16 %v2461, %v2460
    %v2486 = vpack.c.b16 %v2463, %v2462
    %v2487 = vpack.c.b16 %v2465, %v2464
    %v2488 = vpack.c.b16 %v2467, %v2466
    %v2489 = vpack.c.b16 %v2469, %v2468
    %v2490 = vpack.c.b16 %v2471, %v2470
    %v2491 = vpack.c.b16 %v2473, %v2472
    %v2492 = vpack.c.b16 %v2475, %v2474
    %v2493 = vpack.c.b16 %v2477, %v2476
    %v2494 = vpack.c.b16 %v2479, %v2478
    %v2495 = vpack.c.b16 %v2481, %v2480
    %v2496 = vpack.c.b16 %v2483, %v2482
    %v2497 = vpack.c.b16 %v2484, %v2484
    %v2511 = vsel %vm2323, %v2404, 0
    %vm2513 = vcmask 1043456
    %v2515 = vsel %vm2513, %v2497, 0
    %2517 = vmatprep.subr.bf16.mxu0 0
    %2518 = vmatpush1.bf16.msra.mxu0 %v2492
    %2519 = vmatprep.subr.bf16.mxu0 0
    %2520 = vmatpush1.bf16.msra.mxu0 %v2491
    %2521 = vmatprep.subr.bf16.mxu0 0
    %2522 = vmatpush1.bf16.msra.mxu0 %v2490
    %2523 = vmatprep.subr.bf16.mxu0 0
    %2524 = vmatpush1.bf16.msra.mxu0 %v2489
    %2525 = vmatprep.subr.bf16.mxu0 0
    %2526 = vmatpush1.bf16.msra.mxu0 %v2488
    %2527 = vmatprep.subr.bf16.mxu0 0
    %2528 = vmatpush1.bf16.msra.mxu0 %v2487
    %2529 = vmatprep.subr.bf16.mxu0 0
    %2530 = vmatpush1.bf16.msra.mxu0 %v2486
    %2531 = vmatprep.subr.bf16.mxu0 0
    %2532 = vmatpush1.bf16.msra.mxu0 %v2485
    %2533 = vmatprep.subr.bf16.mxu0 0
    %2534 = vmatpush2.bf16.msra.mxu0 0
    %2535 = vmatprep.subr.bf16.mxu0 0
    %2536 = vmatpush2.bf16.msra.mxu0 0
    %2537 = vmatprep.subr.bf16.mxu0 0
    %2538 = vmatpush2.bf16.msra.mxu0 0
    %2539 = vmatprep.subr.bf16.mxu0 0
    %2540 = vmatpush2.bf16.msra.mxu0 %v2515
    %2541 = vmatprep.subr.bf16.mxu0 0
    %2542 = vmatpush2.bf16.msra.mxu0 %v2496
    %2543 = vmatprep.subr.bf16.mxu0 0
    %2544 = vmatpush2.bf16.msra.mxu0 %v2495
    %2545 = vmatprep.subr.bf16.mxu0 0
    %2546 = vmatpush2.bf16.msra.mxu0 %v2494
    %2547 = vmatprep.subr.bf16.mxu0 0
    %2548 = vmatpush2.bf16.msra.mxu0 %v2493
    %2549 = vmatprep.mubr.bf16.mxu0 %v2511
    %2550 = vmatmul.mubr.bf16.gmra.mxu0 %v2403
    %v2551 = vpop.f32.mrf.mxu0
    %v2552 = vadd.f32 %v2434, %v2551
    %v2553 = vpop.f32.mrf.mxu0
    %v2554 = vpop.f32.mrf.mxu0
    %v2555 = vpop.f32.mrf.mxu0
    %2556 = vdwg.mxu0
    %v2557 = vmax.f32 %v2552, 0.0
    %vm2558 = vcmask 818176
    %v2559 = vsel %vm2558, %v2557, 0.0
    %v2560 = vrot.slane %v2559, 4
    %v2561 = vadd.f32 %v2559, %v2560
    %v2562 = vrot.slane %v2561, 2
    %v2563 = vadd.f32 %v2561, %v2562
    %v2564 = vrot.slane %v2563, 1
    %v2565 = vadd.f32 %v2563, %v2564
    %v2566 = vmul.f32 %v2565, 0.125
    %v2567 = vsub.f32 %v2557, %v2566
    %v2568 = vmul.f32 %v2567, %v2567
    %v2569 = vsel %vm2558, %v2568, 0.0
    %v2570 = vrot.slane %v2569, 4
    %v2571 = vadd.f32 %v2569, %v2570
    %v2572 = vrot.slane %v2571, 2
    %v2573 = vadd.f32 %v2571, %v2572
    %v2574 = vrot.slane %v2573, 1
    %v2575 = vadd.f32 %v2573, %v2574
    %v2576 = vmul.f32 %v2575, 0.125
    %v2577 = vadd.f32 %v2576, 1e-05
    %v2578 = vrsqrt.pop %v2577
    %v2579 = vmul.f32 %v2405, %v2578
    %v2580 = vlaneseq
    %v2581 = vshrl.u32 %v2580, 7
    %v2582 = vsub.s32 1, %v2581
    %v2583 = vrot.slane %v2579, %v2582
    %v2584 = vmul.f32 %v2567, %v2583
    %v2585 = vlaneseq
    %v2586 = vshrl.u32 %v2585, 7
    %v2587 = vsub.s32 2, %v2586
    %v2588 = vrot.slane %v2405, %v2587
    %v2589 = vadd.f32 %v2584, %v2588
    %v2590 = vpack.c.bf16 %v2589, %v2589
    %v2591 = vld [vmem:[%s8] sm:$0x1f]
    %v2592 = vld [vmem:[%s7] sm:$0xf]
    %v2593 = vld [vmem:[%s7 + $0x4] sm:$0xf]
    %v2594 = vld [vmem:[%s7 + $0x8] sm:$0xf]
    %v2595 = vld [vmem:[%s7 + $0xc] sm:$0xf]
    %v2596 = vld [vmem:[%s7 + $0x10] sm:$0xf]
    %v2597 = vld [vmem:[%s7 + $0x14] sm:$0xf]
    %v2598 = vld [vmem:[%s7 + $0x18] sm:$0xf]
    %v2599 = vld [vmem:[%s7 + $0x1c] sm:$0xf]
    %v2600 = vld [vmem:[%s7 + $0x20] sm:$0xf]
    %v2601 = vld [vmem:[%s7 + $0x24] sm:$0xf]
    %v2602 = vld [vmem:[%s7 + $0x28] sm:$0xf]
    %v2603 = vld [vmem:[%s7 + $0x2c] sm:$0xf]
    %v2604 = vld [vmem:[%s7 + $0x30] sm:$0x3]
    %v2605 = vlaneseq
    %v2606 = vshrl.u32 %v2605, 7
    %v2607 = vsub.s32 0, %v2606
    %v2608 = vrot.slane %v2591, %v2607
    %v2622 = vunpack.c.l.b16 %v2592
    %v2623 = vunpack.c.l.b16 %v2593
    %v2624 = vunpack.c.l.b16 %v2594
    %v2625 = vunpack.c.l.b16 %v2595
    %v2626 = vunpack.c.l.b16 %v2596
    %v2627 = vunpack.c.l.b16 %v2597
    %v2628 = vunpack.c.l.b16 %v2598
    %v2629 = vunpack.c.l.b16 %v2599
    %v2630 = vunpack.c.l.b16 %v2600
    %v2631 = vunpack.c.l.b16 %v2601
    %v2632 = vunpack.c.l.b16 %v2602
    %v2633 = vunpack.c.l.b16 %v2603
    %v2634 = vunpack.c.l.b16 %v2604
    %v2635 = vpack.c.b16 %v2623, %v2622
    %v2636 = vpack.c.b16 %v2625, %v2624
    %v2637 = vpack.c.b16 %v2627, %v2626
    %v2638 = vpack.c.b16 %v2629, %v2628
    %v2639 = vpack.c.b16 %v2631, %v2630
    %v2640 = vpack.c.b16 %v2633, %v2632
    %v2641 = vpack.c.b16 %v2634, %v2634
    %v2649 = vsel %vm2558, %v2590, 0
    %v2652 = vsel %vm2226, %v2641, 0
    %2654 = vmatprep.subr.bf16.mxu0 0
    %2655 = vmatpush1.bf16.msra.mxu0 0
    %2656 = vmatprep.subr.bf16.mxu0 0
    %2657 = vmatpush1.bf16.msra.mxu0 %v2652
    %2658 = vmatprep.subr.bf16.mxu0 0
    %2659 = vmatpush1.bf16.msra.mxu0 %v2640
    %2660 = vmatprep.subr.bf16.mxu0 0
    %2661 = vmatpush1.bf16.msra.mxu0 %v2639
    %2662 = vmatprep.subr.bf16.mxu0 0
    %2663 = vmatpush1.bf16.msra.mxu0 %v2638
    %2664 = vmatprep.subr.bf16.mxu0 0
    %2665 = vmatpush1.bf16.msra.mxu0 %v2637
    %2666 = vmatprep.subr.bf16.mxu0 0
    %2667 = vmatpush1.bf16.msra.mxu0 %v2636
    %2668 = vmatprep.subr.bf16.mxu0 0
    %2669 = vmatpush1.bf16.msra.mxu0 %v2635
    %2670 = vmatprep.subr.bf16.mxu0 0
    %2671 = vmatpush2.bf16.msra.mxu0 0
    %2672 = vmatprep.subr.bf16.mxu0 0
    %2673 = vmatpush2.bf16.msra.mxu0 0
    %2674 = vmatprep.subr.bf16.mxu0 0
    %2675 = vmatpush2.bf16.msra.mxu0 0
    %2676 = vmatprep.subr.bf16.mxu0 0
    %2677 = vmatpush2.bf16.msra.mxu0 0
    %2678 = vmatprep.subr.bf16.mxu0 0
    %2679 = vmatpush2.bf16.msra.mxu0 0
    %2680 = vmatprep.subr.bf16.mxu0 0
    %2681 = vmatpush2.bf16.msra.mxu0 0
    %2682 = vmatprep.subr.bf16.mxu0 0
    %2683 = vmatpush2.bf16.msra.mxu0 0
    %2684 = vmatprep.subr.bf16.mxu0 0
    %2685 = vmatpush2.bf16.msra.mxu0 0
    %2686 = vmatprep.mubr.bf16.mxu0 0
    %2687 = vmatmul.mubr.bf16.gmra.mxu0 %v2649
    %v2688 = vpop.f32.mrf.mxu0
    %v2689 = vadd.f32 %v2608, %v2688
    %v2690 = vpop.f32.mrf.mxu0
    %v2691 = vpop.f32.mrf.mxu0
    %v2692 = vpop.f32.mrf.mxu0
    %2693 = vdwg.mxu0
    %v2694 = vmax.f32 %v2689, 0.0
    %vm2695 = vcmask 80896
    %v2696 = vsel %vm2695, %v2694, 0.0
    %v2697 = vrot.slane %v2696, 4
    %v2698 = vadd.f32 %v2696, %v2697
    %v2699 = vrot.slane %v2698, 2
    %v2700 = vadd.f32 %v2698, %v2699
    %v2701 = vrot.slane %v2700, 1
    %v2702 = vadd.f32 %v2700, %v2701
    %v2703 = vmul.f32 %v2702, 0.125
    %v2704 = vsub.f32 %v2694, %v2703
    %v2705 = vmul.f32 %v2704, %v2704
    %v2706 = vsel %vm2695, %v2705, 0.0
    %v2707 = vrot.slane %v2706, 4
    %v2708 = vadd.f32 %v2706, %v2707
    %v2709 = vrot.slane %v2708, 2
    %v2710 = vadd.f32 %v2708, %v2709
    %v2711 = vrot.slane %v2710, 1
    %v2712 = vadd.f32 %v2710, %v2711
    %v2713 = vmul.f32 %v2712, 0.125
    %v2714 = vadd.f32 %v2713, 1e-05
    %v2715 = vrsqrt.pop %v2714
    %v2716 = vmul.f32 %v2591, %v2715
    %v2717 = vld [vmem:[%s8 + $0x3] sm:$0x1]
    %v2718 = vld [vmem:[%s8 + $0x4] sm:$0x1]
    %v2720 = vrot.slane %v2716, 1
    %v2722 = vmul.f32 %v2717, %v2720
    %v2724 = vrot.slane %v2591, 2
    %v2726 = vmul.f32 %v2717, %v2724
    %vm2727 = vcmask 73728
    %v2728 = vsel %vm2727, %v2726, 0.0
    %2729 = vadd.xlane.f32.xlu0 %v2728
    %v2730 = vpop.xlane.xlu0 %2729
    %v2731 = vadd.f32 %v2730, %v2718
    %2733 = vset.pattern.permute.xlu0 0
    %2734 = vperm.xlu0 %2733, %v2731
    %v2735 = vpop.permute.xlu0 %2734
    %v2738 = vsel %vm2695, %v2722, 0
    %v2741 = vsel %vm2695, %v2704, 0
    %2743 = vmatprep.subr.mxu0 0.0
    %2744 = vmatpush1.xpose.msra.mxu0 0.0
    %2745 = vmatprep.subr.mxu0 0.0
    %2746 = vmatpush1.xpose.msra.mxu0 0.0
    %2747 = vmatprep.subr.mxu0 0.0
    %2748 = vmatpush1.xpose.msra.mxu0 0.0
    %2749 = vmatprep.subr.mxu0 0.0
    %2750 = vmatpush1.xpose.msra.mxu0 0.0
    %2751 = vmatprep.subr.mxu0 0.0
    %2752 = vmatpush1.xpose.msra.mxu0 0.0
    %2753 = vmatprep.subr.mxu0 0.0
    %2754 = vmatpush1.xpose.msra.mxu0 0.0
    %2755 = vmatprep.subr.mxu0 0.0
    %2756 = vmatpush1.xpose.msra.mxu0 0.0
    %2757 = vmatprep.subr.mxu0 0.0
    %2758 = vmatpush1.xpose.msra.mxu0 0.0
    %2759 = vmatprep.subr.mxu0 0.0
    %2760 = vmatpush1.xpose.msra.mxu0 0.0
    %2761 = vmatprep.subr.mxu0 0.0
    %2762 = vmatpush1.xpose.msra.mxu0 0.0
    %2763 = vmatprep.subr.mxu0 0.0
    %2764 = vmatpush1.xpose.msra.mxu0 0.0
    %2765 = vmatprep.subr.mxu0 0.0
    %2766 = vmatpush1.xpose.msra.mxu0 0.0
    %2767 = vmatprep.subr.mxu0 0.0
    %2768 = vmatpush1.xpose.msra.mxu0 0.0
    %2769 = vmatprep.subr.mxu0 0.0
    %2770 = vmatpush1.xpose.msra.mxu0 0.0
    %2771 = vmatprep.subr.mxu0 0.0
    %2772 = vmatpush1.xpose.msra.mxu0 0.0
    %2773 = vmatprep.subr.mxu0 0.0
    %2774 = vmatpush1.xpose.msra.mxu0 %v2741
    %2775 = vmatprep.subr.mxu0 0.0
    %2776 = vmatpush2.xpose.msra.mxu0 0.0
    %2777 = vmatprep.subr.mxu0 0.0
    %2778 = vmatpush2.xpose.msra.mxu0 0.0
    %2779 = vmatprep.subr.mxu0 0.0
    %2780 = vmatpush2.xpose.msra.mxu0 0.0
    %2781 = vmatprep.subr.mxu0 0.0
    %2782 = vmatpush2.xpose.msra.mxu0 0.0
    %2783 = vmatprep.subr.mxu0 0.0
    %2784 = vmatpush2.xpose.msra.mxu0 0.0
    %2785 = vmatprep.subr.mxu0 0.0
    %2786 = vmatpush2.xpose.msra.mxu0 0.0
    %2787 = vmatprep.subr.mxu0 0.0
    %2788 = vmatpush2.xpose.msra.mxu0 0.0
    %2789 = vmatprep.subr.mxu0 0.0
    %2790 = vmatpush2.xpose.msra.mxu0 0.0
    %2791 = vmatprep.subr.mxu0 0.0
    %2792 = vmatpush2.xpose.msra.mxu0 0.0
    %2793 = vmatprep.subr.mxu0 0.0
    %2794 = vmatpush2.xpose.msra.mxu0 0.0
    %2795 = vmatprep.subr.mxu0 0.0
    %2796 = vmatpush2.xpose.msra.mxu0 0.0
    %2797 = vmatprep.subr.mxu0 0.0
    %2798 = vmatpush2.xpose.msra.mxu0 0.0
    %2799 = vmatprep.subr.mxu0 0.0
    %2800 = vmatpush2.xpose.msra.mxu0 0.0
    %2801 = vmatprep.subr.mxu0 0.0
    %2802 = vmatpush2.xpose.msra.mxu0 0.0
    %2803 = vmatprep.subr.mxu0 0.0
    %2804 = vmatpush2.xpose.msra.mxu0 0.0
    %2805 = vmatprep.subr.mxu0 0.0
    %2806 = vmatpush2.xpose.msra.mxu0 0.0
    %2807 = vmatprep.mubr.f32.mxu0 0.0
    %2808 = vmatmul.mubr.f32.gmra.mxu0 %v2738
    %v2809 = vpop.f32.mrf.mxu0
    %v2810 = vadd.f32 %v2735, %v2809
    %v2811 = vpop.f32.mrf.mxu0
    %2812 = vdwg.mxu0
    %vm2813 = vcmask 57344
    %2814 = vst.msk [vmem:[#allocation5] sm:$0x1] %vm2813, %v2810
    // Predicated region
    $region42: #{tpu_custom_call.1} parent=1 // pred_check
      _
    $region43: #{tpu_custom_call.1} parent=1 // pred_check_branch
      %2816 = sbr.rel (0) target = $region45
    $region44: #{tpu_custom_call.1} parent=1 // pred_region
      %s2818 = ssub.s32 16, 16
      %2819 = vsyncadd [#allocation4], %s2818
      %s2821 = sshll.u32 [#allocation5], 4
      %s2822 = int_to_ptr.vmem [resolvable:$true] %s2821
      %2824 = dma.vmem_to_hbm [thread:$0]  %s2822, 16, %s9, [#allocation4]
    $region45: #{tpu_custom_call.1} parent=1 // pred_fallthru
      _
    // Predicated region
    $region46: #{tpu_custom_call.1} parent=1 // pred_check
      _
    $region47: #{tpu_custom_call.1} parent=1 // pred_check_branch
      %2826 = sbr.rel (0) target = $region49
    $region48: #{tpu_custom_call.1} parent=1 // pred_region
      %2827 = dma.done [#allocation4], 16
    $region49: #{tpu_custom_call.1} parent=1 // pred_fallthru
      _
    %2828 = vsyncpa [#allocation3], 1
    %2829 = vsyncpa [#allocation4], 1

</llo_original>
